<compile_context>
chip_gen: v6e
topology: v6e:2x2x1
jax: 0.10.0
libtpu: 0.0.40
codegen_flags: <defaults>
</compile_context>

<pallas_src>
import jax
import jax.numpy as jnp
import numpy as np
from jax.experimental import pallas as pl
from jax.experimental.pallas import tpu as pltpu


def read_unit_kernel(mem_ref, know_ref, ctrl_ref,
                     w_mem_t_ref, b_mem_ref,
                     wc1_ref, wc2_ref, wa_ref,
                     read_ref):
    # The only large live block: bf16 (BT, S, D). Reused for both passes.
    know = know_ref[...]                                                        # (BT, S, D) bf16
    mem = mem_ref[...]                                                          # (BT, D) f32
    ctrl = ctrl_ref[...]                                                        # (BT, D) f32

    # mem_proj = Linear_D->D(memory[-1]) : tiny (BT,D)x(D,D) MXU matmul.
    mem_proj = jnp.dot(mem, w_mem_t_ref[...],
                       preferred_element_type=jnp.float32) + b_mem_ref[...]     # (BT, D)

    # Fold of concat(2D->D) + attn(D->1) into a per-batch D-vector u.
    # (The per-row constant b_c . ctrl_wa + b_attn is omitted: softmax over the
    #  slot axis is invariant to a per-row constant shift, so this is exact.)
    ctrl_wa = ctrl * wa_ref[...]                                                # (BT, D)
    v1 = jnp.dot(ctrl_wa, wc1_ref[...], preferred_element_type=jnp.float32)     # (BT, D)
    v2 = jnp.dot(ctrl_wa, wc2_ref[...], preferred_element_type=jnp.float32)     # (BT, D)
    u = mem_proj * v1 + v2                                                      # (BT, D)

    # logits[b,s] = sum_d know[b,s,d] * u[b,d]  — lane-axis (D) reduce,
    # bf16 operand extended per-vreg, products/accumulation in f32.
    logits = jnp.sum(know * u[:, None, :], axis=-1)                             # (BT, S)

    # Softmax over the S slots (lane-dense layout). Ragged last tile rows hold
    # garbage but are dropped on writeback (benign).
    m = jnp.max(logits, axis=-1, keepdims=True)                                 # (BT, 1)
    e = jnp.exp(logits - m)                                                     # (BT, S)
    p = e / jnp.sum(e, axis=-1, keepdims=True)                                  # (BT, S)

    # read = sum_s p[b,s] * know[b,s,:]  — reuse the same bf16 block.
    read_ref[...] = jnp.sum(know * p[:, :, None], axis=1)                       # (BT, D)


def read_unit_pallas(memory, know_t, control, params, *,
                     b_tile=None, vmem_limit_bytes=48 * 1024 * 1024):
    """ReadUnit forward.

    memory, control: (B, D) float32 (last memory / control states).
    know_t:          (B, S, D) == PyTorch `know.permute(0, 2, 1)`; bf16 recommended
                     (halves the dominant HBM traffic), f32 also accepted.
    params:          PyTorch-shaped weights
                     (w_mem (D,D), b_mem (D,), w_cat (D,2D), b_c (D,), w_attn (1,D), b_attn (1,)).
    b_tile:          batch rows fused per grid step; if None it is derived from the
                     VMEM budget (know dominates: ~10 B/element after the fold).
    vmem_limit_bytes: explicit scoped-VMEM cap (raises the 16/32 MiB defaults on
                     v5e/v6e while staying under v7x's 64 MiB physical VMEM).
    """
    memory = jnp.asarray(memory, jnp.float32)
    control = jnp.asarray(control, jnp.float32)
    B, D = memory.shape
    _, S, _ = know_t.shape
    w_mem, b_mem, w_cat, b_c, w_attn, b_attn = params
    del b_c, b_attn  # per-row constant logit shift -> softmax-invariant (exact omission)

    # Host-side weight prep: pre-transpose, split W_cat into its two D-column
    # halves so the kernel never transposes or lane-slices.
    w_mem_t = jnp.asarray(w_mem, jnp.float32).T                 # (D, D)
    b_mem2 = jnp.asarray(b_mem, jnp.float32).reshape(1, D)
    w_cat = jnp.asarray(w_cat, jnp.float32)                     # (D, 2D) PyTorch layout
    w_cat1 = w_cat[:, :D]                                       # multiplies (mem_proj * know)
    w_cat2 = w_cat[:, D:]                                       # multiplies know
    wa = jnp.asarray(w_attn, jnp.float32).reshape(1, D)

    # Batch tile from VMEM budget; multiple of 8; >= 2 grid steps when possible
    # so v7x's two TensorCores both get work along the 'parallel' axis.
    if b_tile is None:
        bytes_per_row = S * D * 10   # double-buffered bf16 know + transient f32 products
        bt = max(8, int(0.7 * vmem_limit_bytes) // max(1, bytes_per_row))
    else:
        bt = int(b_tile)
    bt = min(bt, B)
    if B >= 16:
        bt = min(bt, pl.cdiv(B, 2))
    bt = max(8, (bt // 8) * 8)       # sublane alignment
    bt = max(1, min(bt, B))

    grid = (pl.cdiv(B, bt),)
    rep = lambda shape: pl.BlockSpec(shape, lambda i: (0,) * len(shape))

    return pl.pallas_call(
        read_unit_kernel,
        out_shape=jax.ShapeDtypeStruct((B, D), jnp.float32),
        grid_spec=pltpu.PrefetchScalarGridSpec(
            num_scalar_prefetch=0,
            grid=grid,
            in_specs=[
                pl.BlockSpec((bt, D), lambda i: (i, 0)),         # memory[-1]
                pl.BlockSpec((bt, S, D), lambda i: (i, 0, 0)),   # know (B, S, D), bf16 in HBM
                pl.BlockSpec((bt, D), lambda i: (i, 0)),         # control[-1]
                rep((D, D)),                                     # W_mem^T
                rep((1, D)),                                     # b_mem
                rep((D, D)),                                     # W_cat[:, :D]
                rep((D, D)),                                     # W_cat[:, D:]
                rep((1, D)),                                     # W_attn
            ],
            out_specs=pl.BlockSpec((bt, D), lambda i: (i, 0)),
        ),
        compiler_params=pltpu.CompilerParams(
            dimension_semantics=("parallel",),
            vmem_limit_bytes=vmem_limit_bytes),
    )(memory, know_t, control, w_mem_t, b_mem2, w_cat1, w_cat2, wa)


def read_unit_ref(memory, know, control, params):
    """Pure-JAX reference mirroring the PyTorch code (know in PyTorch layout (B, D, S))."""
    w_mem, b_mem, w_cat, b_c, w_attn, b_attn = params
    mem = memory @ w_mem.T + b_mem                         # (B, D)
    mem = mem[:, :, None]                                  # (B, D, 1)
    cat = jnp.concatenate([mem * know, know], axis=1)      # (B, 2D, S)
    cat = jnp.transpose(cat, (0, 2, 1))                    # (B, S, 2D)
    concat = cat @ w_cat.T + b_c                           # (B, S, D)
    attn_in = concat * control[:, None, :]                 # (B, S, D)
    logits = (attn_in @ w_attn.T)[:, :, 0] + b_attn        # (B, S)
    attn = jax.nn.softmax(logits, axis=1)                  # (B, S)
    read = jnp.sum(attn[:, None, :] * know, axis=2)        # (B, D)
    return read


if __name__ == "__main__":
    # Small demo shapes: batch 16, hidden dim 32, 16 knowledge slots (4x4 spatial).
    # (Production MAC shapes have D a multiple of 128 and S a multiple of 8/16,
    #  which keeps every access lane-dense / relayout-free; the demo just needs
    #  to exercise the code path.)
    B, D, S = 16, 32, 16

    key = jax.random.PRNGKey(0)
    ks = jax.random.split(key, 9)

    # Deterministic synthetic parameters (shapes from the module's __init__):
    #   mem:    Linear(D, D)    -> W (D, D),  b (D,)
    #   concat: Linear(2D, D)   -> W (D, 2D), b (D,)
    #   attn:   Linear(D, 1)    -> W (1, D),  b (1,)
    scale = 0.1
    w_mem = scale * jax.random.normal(ks[0], (D, D), jnp.float32)
    b_mem = scale * jax.random.normal(ks[1], (D,), jnp.float32)
    w_cat = scale * jax.random.normal(ks[2], (D, 2 * D), jnp.float32)
    b_c = scale * jax.random.normal(ks[3], (D,), jnp.float32)
    w_attn = scale * jax.random.normal(ks[4], (1, D), jnp.float32)
    b_attn = scale * jax.random.normal(ks[5], (1,), jnp.float32)
    params = (w_mem, b_mem, w_cat, b_c, w_attn, b_attn)

    # Inputs (only the last element of the memory / control lists is used).
    memory_last = jax.random.normal(ks[6], (B, D), jnp.float32)
    know = jax.random.normal(ks[7], (B, D, S), jnp.float32)     # PyTorch layout (B, D, S)
    control_last = jax.random.normal(ks[8], (B, D), jnp.float32)

    # Kernel layout: D on the lane axis; know carried in bf16 to halve HBM traffic.
    know_t_bf16 = jnp.transpose(know, (0, 2, 1)).astype(jnp.bfloat16)   # (B, S, D)

    # b_tile left to the auto-derivation: at these shapes it yields bt=8 -> a
    # 2-step 'parallel' grid (exercises the batch tiling and keeps one step per
    # TensorCore on v7x).
    out = read_unit_pallas(memory_last, know_t_bf16, control_last, params)
    out = jax.block_until_ready(out)

    # Reference on the same bf16-quantized knowledge tensor, so the remaining
    # differences are only f32 accumulation order (the bias terms dropped in the
    # kernel are softmax-invariant, hence exact).
    know_q = jnp.transpose(know_t_bf16.astype(jnp.float32), (0, 2, 1))  # back to (B, D, S)
    ref = read_unit_ref(memory_last, know_q, control_last, params)
    np.testing.assert_allclose(np.asarray(out), np.asarray(ref), rtol=1e-2, atol=1e-2)

    # TODO(synk): self.saved_attn side-effect (list append of attention maps) is
    # stateful logging and is not reproduced; the kernel returns `read` only.
    print("KERNEL_OK")
</pallas_src>

<mosaic_0001>
module attributes {stable_mosaic.version = 11 : i64} {
  func.func @read_unit_kernel(%arg0: i32, %arg1: memref<8x32xf32, #tpu.memory_space<vmem>>, %arg2: memref<8x16x32xbf16, #tpu.memory_space<vmem>>, %arg3: memref<8x32xf32, #tpu.memory_space<vmem>>, %arg4: memref<32x32xf32, #tpu.memory_space<vmem>>, %arg5: memref<1x32xf32, #tpu.memory_space<vmem>>, %arg6: memref<32x32xf32, #tpu.memory_space<vmem>>, %arg7: memref<32x32xf32, #tpu.memory_space<vmem>>, %arg8: memref<1x32xf32, #tpu.memory_space<vmem>>, %arg9: memref<8x32xf32, #tpu.memory_space<vmem>>) attributes {dimension_semantics = [#tpu.dimension_semantics<parallel>], iteration_bounds = array<i64: 2>, scalar_prefetch = 0 : i64, scratch_operands = 0 : i64, tpu.core_type = #tpu.core_type<tc>, window_params = [{transform_indices = @transform_0, window_bounds = array<i64: 8, 32>}, {transform_indices = @transform_1, window_bounds = array<i64: 8, 16, 32>}, {transform_indices = @transform_2, window_bounds = array<i64: 8, 32>}, {pipeline_mode = #tpu.pipeline_mode<synchronous>, transform_indices = @transform_3, window_bounds = array<i64: 32, 32>}, {pipeline_mode = #tpu.pipeline_mode<synchronous>, transform_indices = @transform_4, window_bounds = array<i64: 1, 32>}, {pipeline_mode = #tpu.pipeline_mode<synchronous>, transform_indices = @transform_5, window_bounds = array<i64: 32, 32>}, {pipeline_mode = #tpu.pipeline_mode<synchronous>, transform_indices = @transform_6, window_bounds = array<i64: 32, 32>}, {pipeline_mode = #tpu.pipeline_mode<synchronous>, transform_indices = @transform_7, window_bounds = array<i64: 1, 32>}, {transform_indices = @transform_8, window_bounds = array<i64: 8, 32>}]} {
    %c0 = arith.constant 0 : index
    %c0_0 = arith.constant 0 : index
    %c0_1 = arith.constant 0 : index
    %0 = vector.load %arg2[%c0, %c0_0, %c0_1] : memref<8x16x32xbf16, #tpu.memory_space<vmem>>, vector<8x16x32xbf16>
    %c0_2 = arith.constant 0 : index
    %c0_3 = arith.constant 0 : index
    %1 = vector.load %arg1[%c0_2, %c0_3] : memref<8x32xf32, #tpu.memory_space<vmem>>, vector<8x32xf32>
    %c0_4 = arith.constant 0 : index
    %c0_5 = arith.constant 0 : index
    %2 = vector.load %arg3[%c0_4, %c0_5] : memref<8x32xf32, #tpu.memory_space<vmem>>, vector<8x32xf32>
    %c0_6 = arith.constant 0 : index
    %c0_7 = arith.constant 0 : index
    %3 = vector.load %arg4[%c0_6, %c0_7] : memref<32x32xf32, #tpu.memory_space<vmem>>, vector<32x32xf32>
    %cst = arith.constant dense<0.000000e+00> : vector<8x32xf32>
    %4 = tpu.matmul %1, %3, %cst {dimension_numbers = #tpu.dot_dimension_numbers<[1], [0], [0], [1], [0, 0, 1, 1], [], []>} : vector<8x32xf32>, vector<32x32xf32>, vector<8x32xf32> -> vector<8x32xf32>
    %c0_8 = arith.constant 0 : index
    %c0_9 = arith.constant 0 : index
    %5 = vector.load %arg5[%c0_8, %c0_9] : memref<1x32xf32, #tpu.memory_space<vmem>>, vector<1x32xf32>
    %6 = vector.broadcast %5 : vector<1x32xf32> to vector<8x32xf32>
    %7 = arith.addf %4, %6 : vector<8x32xf32>
    %c0_10 = arith.constant 0 : index
    %c0_11 = arith.constant 0 : index
    %8 = vector.load %arg8[%c0_10, %c0_11] : memref<1x32xf32, #tpu.memory_space<vmem>>, vector<1x32xf32>
    %9 = vector.broadcast %8 : vector<1x32xf32> to vector<8x32xf32>
    %10 = arith.mulf %2, %9 : vector<8x32xf32>
    %c0_12 = arith.constant 0 : index
    %c0_13 = arith.constant 0 : index
    %11 = vector.load %arg6[%c0_12, %c0_13] : memref<32x32xf32, #tpu.memory_space<vmem>>, vector<32x32xf32>
    %cst_14 = arith.constant dense<0.000000e+00> : vector<8x32xf32>
    %12 = tpu.matmul %10, %11, %cst_14 {dimension_numbers = #tpu.dot_dimension_numbers<[1], [0], [0], [1], [0, 0, 1, 1], [], []>} : vector<8x32xf32>, vector<32x32xf32>, vector<8x32xf32> -> vector<8x32xf32>
    %c0_15 = arith.constant 0 : index
    %c0_16 = arith.constant 0 : index
    %13 = vector.load %arg7[%c0_15, %c0_16] : memref<32x32xf32, #tpu.memory_space<vmem>>, vector<32x32xf32>
    %cst_17 = arith.constant dense<0.000000e+00> : vector<8x32xf32>
    %14 = tpu.matmul %10, %13, %cst_17 {dimension_numbers = #tpu.dot_dimension_numbers<[1], [0], [0], [1], [0, 0, 1, 1], [], []>} : vector<8x32xf32>, vector<32x32xf32>, vector<8x32xf32> -> vector<8x32xf32>
    %15 = arith.mulf %7, %12 : vector<8x32xf32>
    %16 = arith.addf %15, %14 : vector<8x32xf32>
    %17 = vector.shape_cast %16 : vector<8x32xf32> to vector<8x1x32xf32>
    %18 = arith.extf %0 : vector<8x16x32xbf16> to vector<8x16x32xf32>
    %19 = vector.broadcast %17 : vector<8x1x32xf32> to vector<8x16x32xf32>
    %20 = arith.mulf %18, %19 : vector<8x16x32xf32>
    %cst_18 = arith.constant dense<0.000000e+00> : vector<8x16xf32>
    %21 = vector.multi_reduction <add>, %20, %cst_18 [2] : vector<8x16x32xf32> to vector<8x16xf32>
    %cst_19 = arith.constant dense<0xFF800000> : vector<8xf32>
    %22 = vector.multi_reduction <maximumf>, %21, %cst_19 [1] : vector<8x16xf32> to vector<8xf32>
    %23 = vector.shape_cast %22 : vector<8xf32> to vector<8x1xf32>
    %24 = vector.broadcast %23 : vector<8x1xf32> to vector<8x16xf32>
    %25 = arith.subf %21, %24 : vector<8x16xf32>
    %26 = math.exp %25 : vector<8x16xf32>
    %cst_20 = arith.constant dense<0.000000e+00> : vector<8xf32>
    %27 = vector.multi_reduction <add>, %26, %cst_20 [1] : vector<8x16xf32> to vector<8xf32>
    %28 = vector.shape_cast %27 : vector<8xf32> to vector<8x1xf32>
    %29 = vector.broadcast %28 : vector<8x1xf32> to vector<8x16xf32>
    %30 = arith.divf %26, %29 : vector<8x16xf32>
    %31 = vector.shape_cast %30 : vector<8x16xf32> to vector<8x16x1xf32>
    %32 = arith.extf %0 : vector<8x16x32xbf16> to vector<8x16x32xf32>
    %33 = vector.broadcast %31 : vector<8x16x1xf32> to vector<8x16x32xf32>
    %34 = arith.mulf %32, %33 : vector<8x16x32xf32>
    %cst_21 = arith.constant dense<0.000000e+00> : vector<8x32xf32>
    %35 = vector.multi_reduction <add>, %34, %cst_21 [1] : vector<8x16x32xf32> to vector<8x32xf32>
    %c0_22 = arith.constant 0 : index
    %c0_23 = arith.constant 0 : index
    %36 = vector.load %arg9[%c0_22, %c0_23] : memref<8x32xf32, #tpu.memory_space<vmem>>, vector<8x32xf32>
    tpu.vector_store %arg9[%c0_22, %c0_23], %35 {strides = array<i32>} : memref<8x32xf32, #tpu.memory_space<vmem>>, vector<8x32xf32>,
    return
  }
  func.func @transform_0(%arg0: i32) -> (i32, i32) {
    %c0_i32 = arith.constant 0 : i32
    %c0_i32_0 = arith.constant 0 : i32
    return %arg0, %c0_i32 : i32, i32
  }
  func.func @transform_1(%arg0: i32) -> (i32, i32, i32) {
    %c0_i32 = arith.constant 0 : i32
    %c0_i32_0 = arith.constant 0 : i32
    %c0_i32_1 = arith.constant 0 : i32
    return %arg0, %c0_i32, %c0_i32_0 : i32, i32, i32
  }
  func.func @transform_2(%arg0: i32) -> (i32, i32) {
    %c0_i32 = arith.constant 0 : i32
    %c0_i32_0 = arith.constant 0 : i32
    return %arg0, %c0_i32 : i32, i32
  }
  func.func @transform_3(%arg0: i32) -> (i32, i32) {
    %c0_i32 = arith.constant 0 : i32
    %c0_i32_0 = arith.constant 0 : i32
    %c0_i32_1 = arith.constant 0 : i32
    return %c0_i32, %c0_i32_0 : i32, i32
  }
  func.func @transform_4(%arg0: i32) -> (i32, i32) {
    %c0_i32 = arith.constant 0 : i32
    %c0_i32_0 = arith.constant 0 : i32
    %c0_i32_1 = arith.constant 0 : i32
    return %c0_i32, %c0_i32_0 : i32, i32
  }
  func.func @transform_5(%arg0: i32) -> (i32, i32) {
    %c0_i32 = arith.constant 0 : i32
    %c0_i32_0 = arith.constant 0 : i32
    %c0_i32_1 = arith.constant 0 : i32
    return %c0_i32, %c0_i32_0 : i32, i32
  }
  func.func @transform_6(%arg0: i32) -> (i32, i32) {
    %c0_i32 = arith.constant 0 : i32
    %c0_i32_0 = arith.constant 0 : i32
    %c0_i32_1 = arith.constant 0 : i32
    return %c0_i32, %c0_i32_0 : i32, i32
  }
  func.func @transform_7(%arg0: i32) -> (i32, i32) {
    %c0_i32 = arith.constant 0 : i32
    %c0_i32_0 = arith.constant 0 : i32
    %c0_i32_1 = arith.constant 0 : i32
    return %c0_i32, %c0_i32_0 : i32, i32
  }
  func.func @transform_8(%arg0: i32) -> (i32, i32) {
    %c0_i32 = arith.constant 0 : i32
    %c0_i32_0 = arith.constant 0 : i32
    return %arg0, %c0_i32 : i32, i32
  }
}

</mosaic_0001>

<llo_original>
// kernel: tpu_custom_call.1
$region0: #{tpu_custom_call.1}
  #allocation0 [shape = 'u32[]', space=smem, size = 0x4, offset = 0x4, fixed_abs, tag = 'smem constant byte address 0x4 - core index']
  #allocation1 [shape = 'u32[144,128]{1,0:T(1,128)}', space=vmem, size = 0x12000, scoped, tag = 'internal scratch']
  %s0 = inlined_call_operand.hbm [shape: f32[16,32], index: 0, kind: input, shape index: {}]
  %s1 = inlined_call_operand.hbm [shape: bf16[16,16,32], index: 1, kind: input, shape index: {}]
  %s2 = inlined_call_operand.hbm [shape: f32[16,32], index: 2, kind: input, shape index: {}]
  %s3 = inlined_call_operand.hbm [shape: f32[32,32], index: 3, kind: input, shape index: {}]
  %s4 = inlined_call_operand.vmem [shape: f32[1,32], index: 4, kind: input, shape index: {}]
  %s5 = inlined_call_operand.hbm [shape: f32[32,32], index: 5, kind: input, shape index: {}]
  %s6 = inlined_call_operand.hbm [shape: f32[32,32], index: 6, kind: input, shape index: {}]
  %s7 = inlined_call_operand.vmem [shape: f32[1,32], index: 7, kind: input, shape index: {}]
  %s8 = inlined_call_operand.hbm [shape: f32[16,32], index: 8, kind: output, shape index: {}]
  %s9 = sld [smem:[#allocation0]]
  $region89: #{tpu_custom_call.1} parent=0
    _
  %s11 = ssub.s32 1, %s9
  %s12 = scalar_select 0, %s11, %s9
  $region1: #{tpu_custom_call.1} parent=0
    #allocation2 [shape = 'u8[8192]{0}', space=vmem, size = 0x2000, scoped, tag = 'input window, operand 0']
    #allocation3 [shape = 's32[2]{0}', space=sflag, size = 0x8, scoped, tag = 'scoped memory for tpu_custom_call.1']
    #allocation4 [shape = 's32[2]{0}', space=sflag, size = 0x8, scoped, tag = 'scoped memory for tpu_custom_call.1']
    #allocation5 [shape = 'u8[65536]{0}', space=vmem, size = 0x10000, scoped, tag = 'input window, operand 1']
    #allocation6 [shape = 's32[2]{0}', space=sflag, size = 0x8, scoped, tag = 'scoped memory for tpu_custom_call.1']
    #allocation7 [shape = 'u8[8192]{0}', space=vmem, size = 0x2000, scoped, tag = 'input window, operand 2']
    #allocation8 [shape = 'u8[16384]{0}', space=vmem, size = 0x4000, scoped, tag = 'input window, operand 3, single buffered']
    #allocation9 [shape = 's32[1]{0}', space=sflag, size = 0x4, scoped, tag = 'scoped memory for tpu_custom_call.1']
    #allocation10 [shape = 'u8[16384]{0}', space=vmem, size = 0x4000, scoped, tag = 'input window, operand 5, single buffered']
    #allocation11 [shape = 'u8[16384]{0}', space=vmem, size = 0x4000, scoped, tag = 'input window, operand 6, single buffered']
    #allocation12 [shape = 's32[1]{0}', space=sflag, size = 0x4, scoped, tag = 'scoped memory for tpu_custom_call.1']
    #allocation13 [shape = 'u8[8192]{0}', space=vmem, size = 0x2000, scoped, tag = 'output window, operand 0']
    %13 = vsyncpa [#allocation3], 0
    %s14 = scalar_lea.sflag [#allocation3], 1
    %15 = vsyncpa %s14, 0
    %16 = vsyncpa [#allocation6], 0
    %s17 = scalar_lea.sflag [#allocation6], 1
    %18 = vsyncpa %s17, 0
    %19 = vsyncpa [#allocation9], 0
    %20 = vsyncpa [#allocation12], 0
    %21 = vsyncpa [#allocation4], 0
    %s22 = scalar_lea.sflag [#allocation4], 1
    %23 = vsyncpa %s22, 0
    loop: start=0, step=1, limit=4
    $region2: #{tpu_custom_call.1} parent=1 // loop_pre_header
      _
    $region3: #{tpu_custom_call.1} parent=1 // loop_header
      %s25 = sphi 0, %s29
      %p26 = scmp.ge.s32.totalorder %s25, 4
      %s35 = sphi 0, %s37
      %s38 = sphi 0, %s35
      %s39 = sphi 0, %s38
      %s55 = sphi 0, %s39
      %s61 = sphi 0, %s63
      %s64 = sphi 0, %s61
      %s65 = sphi 0, %s64
      %s81 = sphi 0, %s65
      %s87 = sphi 0, %s89
      %s90 = sphi 0, %s87
      %s91 = sphi 0, %s90
      %s107 = sphi 0, %s91
      %s111 = sphi 0, %s111
      %s113 = sphi 0, %s111
      %s114 = sphi 0, %s113
      %s128 = sphi 0, %s114
      %s132 = sphi 0, %s132
      %s134 = sphi 0, %s132
      %s135 = sphi 0, %s134
      %s149 = sphi 0, %s135
      %s153 = sphi 0, %s153
      %s155 = sphi 0, %s153
      %s156 = sphi 0, %s155
      %s170 = sphi 0, %s156
      %s174 = sphi 0, %s174
      %s176 = sphi 0, %s174
      %s177 = sphi 0, %s176
      %s191 = sphi 0, %s177
      %s195 = sphi 0, %s195
      %s197 = sphi 0, %s195
      %s198 = sphi 0, %s197
      %s212 = sphi 0, %s198
      %s218 = sphi 0, %s220
      %s221 = sphi 0, %s218
      %s222 = sphi 0, %s221
      %s238 = sphi 0, %s222
    $region4: #{tpu_custom_call.1} parent=1 // loop_header_branch
      %28 = sbr.rel (%p26) target = $region8
    $region5: #{tpu_custom_call.1} parent=1 // loop_body
      %s30 = ssub.s32 %s25, 1
      %s31 = ssub.s32 %s25, 2
      %s32 = sadd.s32 %s25, 1
      %s33 = ssub.s32 %s25, %s32
      %p34 = scmp.eq.s32.totalorder %s33, 0
      %s36 = sadd.s32 %s35, 1
      %s37 = scalar_select %p34, %s35, %s36
      %p40 = pneg %p34
      %p41 = scmp.eq.s32.totalorder %s25, 1
      %p42 = por %p40, %p41
      %p43 = scmp.ne.s32.totalorder %s35, %s38
      %p44 = scmp.eq.s32.totalorder %s25, 0
      %p45 = por %p43, %p44
      %p46 = scmp.ne.s32.totalorder %s35, %s38
      %p47 = scmp.eq.s32.totalorder %s30, 1
      %p48 = por %p46, %p47
      %p49 = scmp.ne.s32.totalorder %s38, %s39
      %p50 = scmp.eq.s32.totalorder %s30, 0
      %p51 = por %p49, %p50
      %p52 = scmp.ne.s32.totalorder %s38, %s39
      %p53 = scmp.eq.s32.totalorder %s31, 1
      %p54 = por %p52, %p53
      %p56 = scmp.ne.s32.totalorder %s39, %s55
      %p57 = scmp.eq.s32.totalorder %s31, 0
      %p58 = por %p56, %p57
      %s59 = ssub.s32 %s25, %s32
      %p60 = scmp.eq.s32.totalorder %s59, 0
      %s62 = sadd.s32 %s61, 1
      %s63 = scalar_select %p60, %s61, %s62
      %p66 = pneg %p60
      %p67 = scmp.eq.s32.totalorder %s25, 1
      %p68 = por %p66, %p67
      %p69 = scmp.ne.s32.totalorder %s61, %s64
      %p70 = scmp.eq.s32.totalorder %s25, 0
      %p71 = por %p69, %p70
      %p72 = scmp.ne.s32.totalorder %s61, %s64
      %p73 = scmp.eq.s32.totalorder %s30, 1
      %p74 = por %p72, %p73
      %p75 = scmp.ne.s32.totalorder %s64, %s65
      %p76 = scmp.eq.s32.totalorder %s30, 0
      %p77 = por %p75, %p76
      %p78 = scmp.ne.s32.totalorder %s64, %s65
      %p79 = scmp.eq.s32.totalorder %s31, 1
      %p80 = por %p78, %p79
      %p82 = scmp.ne.s32.totalorder %s65, %s81
      %p83 = scmp.eq.s32.totalorder %s31, 0
      %p84 = por %p82, %p83
      %s85 = ssub.s32 %s25, %s32
      %p86 = scmp.eq.s32.totalorder %s85, 0
      %s88 = sadd.s32 %s87, 1
      %s89 = scalar_select %p86, %s87, %s88
      %p92 = pneg %p86
      %p93 = scmp.eq.s32.totalorder %s25, 1
      %p94 = por %p92, %p93
      %p95 = scmp.ne.s32.totalorder %s87, %s90
      %p96 = scmp.eq.s32.totalorder %s25, 0
      %p97 = por %p95, %p96
      %p98 = scmp.ne.s32.totalorder %s87, %s90
      %p99 = scmp.eq.s32.totalorder %s30, 1
      %p100 = por %p98, %p99
      %p101 = scmp.ne.s32.totalorder %s90, %s91
      %p102 = scmp.eq.s32.totalorder %s30, 0
      %p103 = por %p101, %p102
      %p104 = scmp.ne.s32.totalorder %s90, %s91
      %p105 = scmp.eq.s32.totalorder %s31, 1
      %p106 = por %p104, %p105
      %p108 = scmp.ne.s32.totalorder %s91, %s107
      %p109 = scmp.eq.s32.totalorder %s31, 0
      %p110 = por %p108, %p109
      %s112 = sadd.s32 %s111, 1
      %p115 = scmp.eq.s32.totalorder %s25, 1
      %p116 = scmp.ne.s32.totalorder %s111, %s113
      %p117 = scmp.eq.s32.totalorder %s25, 0
      %p118 = por %p116, %p117
      %p119 = scmp.ne.s32.totalorder %s111, %s113
      %p120 = scmp.eq.s32.totalorder %s30, 1
      %p121 = por %p119, %p120
      %p122 = scmp.ne.s32.totalorder %s113, %s114
      %p123 = scmp.eq.s32.totalorder %s30, 0
      %p124 = por %p122, %p123
      %p125 = scmp.ne.s32.totalorder %s113, %s114
      %p126 = scmp.eq.s32.totalorder %s31, 1
      %p127 = por %p125, %p126
      %p129 = scmp.ne.s32.totalorder %s114, %s128
      %p130 = scmp.eq.s32.totalorder %s31, 0
      %p131 = por %p129, %p130
      %s133 = sadd.s32 %s132, 1
      %p136 = scmp.eq.s32.totalorder %s25, 1
      %p137 = scmp.ne.s32.totalorder %s132, %s134
      %p138 = scmp.eq.s32.totalorder %s25, 0
      %p139 = por %p137, %p138
      %p140 = scmp.ne.s32.totalorder %s132, %s134
      %p141 = scmp.eq.s32.totalorder %s30, 1
      %p142 = por %p140, %p141
      %p143 = scmp.ne.s32.totalorder %s134, %s135
      %p144 = scmp.eq.s32.totalorder %s30, 0
      %p145 = por %p143, %p144
      %p146 = scmp.ne.s32.totalorder %s134, %s135
      %p147 = scmp.eq.s32.totalorder %s31, 1
      %p148 = por %p146, %p147
      %p150 = scmp.ne.s32.totalorder %s135, %s149
      %p151 = scmp.eq.s32.totalorder %s31, 0
      %p152 = por %p150, %p151
      %s154 = sadd.s32 %s153, 1
      %p157 = scmp.eq.s32.totalorder %s25, 1
      %p158 = scmp.ne.s32.totalorder %s153, %s155
      %p159 = scmp.eq.s32.totalorder %s25, 0
      %p160 = por %p158, %p159
      %p161 = scmp.ne.s32.totalorder %s153, %s155
      %p162 = scmp.eq.s32.totalorder %s30, 1
      %p163 = por %p161, %p162
      %p164 = scmp.ne.s32.totalorder %s155, %s156
      %p165 = scmp.eq.s32.totalorder %s30, 0
      %p166 = por %p164, %p165
      %p167 = scmp.ne.s32.totalorder %s155, %s156
      %p168 = scmp.eq.s32.totalorder %s31, 1
      %p169 = por %p167, %p168
      %p171 = scmp.ne.s32.totalorder %s156, %s170
      %p172 = scmp.eq.s32.totalorder %s31, 0
      %p173 = por %p171, %p172
      %s175 = sadd.s32 %s174, 1
      %p178 = scmp.eq.s32.totalorder %s25, 1
      %p179 = scmp.ne.s32.totalorder %s174, %s176
      %p180 = scmp.eq.s32.totalorder %s25, 0
      %p181 = por %p179, %p180
      %p182 = scmp.ne.s32.totalorder %s174, %s176
      %p183 = scmp.eq.s32.totalorder %s30, 1
      %p184 = por %p182, %p183
      %p185 = scmp.ne.s32.totalorder %s176, %s177
      %p186 = scmp.eq.s32.totalorder %s30, 0
      %p187 = por %p185, %p186
      %p188 = scmp.ne.s32.totalorder %s176, %s177
      %p189 = scmp.eq.s32.totalorder %s31, 1
      %p190 = por %p188, %p189
      %p192 = scmp.ne.s32.totalorder %s177, %s191
      %p193 = scmp.eq.s32.totalorder %s31, 0
      %p194 = por %p192, %p193
      %s196 = sadd.s32 %s195, 1
      %p199 = scmp.eq.s32.totalorder %s25, 1
      %p200 = scmp.ne.s32.totalorder %s195, %s197
      %p201 = scmp.eq.s32.totalorder %s25, 0
      %p202 = por %p200, %p201
      %p203 = scmp.ne.s32.totalorder %s195, %s197
      %p204 = scmp.eq.s32.totalorder %s30, 1
      %p205 = por %p203, %p204
      %p206 = scmp.ne.s32.totalorder %s197, %s198
      %p207 = scmp.eq.s32.totalorder %s30, 0
      %p208 = por %p206, %p207
      %p209 = scmp.ne.s32.totalorder %s197, %s198
      %p210 = scmp.eq.s32.totalorder %s31, 1
      %p211 = por %p209, %p210
      %p213 = scmp.ne.s32.totalorder %s198, %s212
      %p214 = scmp.eq.s32.totalorder %s31, 0
      %p215 = por %p213, %p214
      %s216 = ssub.s32 %s25, %s32
      %p217 = scmp.eq.s32.totalorder %s216, 0
      %s219 = sadd.s32 %s218, 1
      %s220 = scalar_select %p217, %s218, %s219
      %p223 = pneg %p217
      %p224 = scmp.eq.s32.totalorder %s25, 1
      %p225 = por %p223, %p224
      %p226 = scmp.ne.s32.totalorder %s218, %s221
      %p227 = scmp.eq.s32.totalorder %s25, 0
      %p228 = por %p226, %p227
      %p229 = scmp.ne.s32.totalorder %s218, %s221
      %p230 = scmp.eq.s32.totalorder %s30, 1
      %p231 = por %p229, %p230
      %p232 = scmp.ne.s32.totalorder %s221, %s222
      %p233 = scmp.eq.s32.totalorder %s30, 0
      %p234 = por %p232, %p233
      %p235 = scmp.ne.s32.totalorder %s221, %s222
      %p236 = scmp.eq.s32.totalorder %s31, 1
      %p237 = por %p235, %p236
      %p239 = scmp.ne.s32.totalorder %s222, %s238
      %p240 = scmp.eq.s32.totalorder %s31, 0
      %p241 = por %p239, %p240
      %p242 = scmp.le.s32.totalorder 1, %s25
      %p243 = scmp.lt.s32.totalorder %s25, 3
      %p244 = pnand %p242, %p243
      %p245 = pneg %p244
      // Predicated region
      $region9: #{tpu_custom_call.1} parent=5 // pred_check
        _
      $region10: #{tpu_custom_call.1} parent=5 // pred_check_branch
        %247 = sbr.rel (%p244) target = $region12
      $region11: #{tpu_custom_call.1} parent=5 // pred_region
        %s248 = ssub.s32 %s25, 1
        // Predicated region
        $region13: #{tpu_custom_call.1} parent=11 // pred_check
          %p249 = pneg %p124
        $region14: #{tpu_custom_call.1} parent=11 // pred_check_branch
          %251 = sbr.rel (%p249) target = $region16
        $region15: #{tpu_custom_call.1} parent=11 // pred_region
          %s253 = ssub.s32 512, 512
          %254 = vsyncadd [#allocation9], %s253
          %s255 = sshll.u32 [#allocation8], 4
          %s256 = int_to_ptr.vmem [resolvable:$true] %s255
          %261 = dma.hbm_to_vmem [thread:$0]  %s3, 512, %s256, [#allocation9], 128, 128, 8
        $region16: #{tpu_custom_call.1} parent=11 // pred_fallthru
          _
        // Predicated region
        $region17: #{tpu_custom_call.1} parent=11 // pred_check
          %p262 = pneg %p145
        $region18: #{tpu_custom_call.1} parent=11 // pred_check_branch
          %264 = sbr.rel (%p262) target = $region20
        $region19: #{tpu_custom_call.1} parent=11 // pred_region
          _
        $region20: #{tpu_custom_call.1} parent=11 // pred_fallthru
          _
        // Predicated region
        $region21: #{tpu_custom_call.1} parent=11 // pred_check
          %p265 = pneg %p166
        $region22: #{tpu_custom_call.1} parent=11 // pred_check_branch
          %267 = sbr.rel (%p265) target = $region24
        $region23: #{tpu_custom_call.1} parent=11 // pred_region
          %s269 = ssub.s32 512, 512
          %270 = vsyncadd [#allocation9], %s269
          %s271 = sshll.u32 [#allocation10], 4
          %s272 = int_to_ptr.vmem [resolvable:$true] %s271
          %277 = dma.hbm_to_vmem [thread:$0]  %s5, 512, %s272, [#allocation9], 128, 128, 8
        $region24: #{tpu_custom_call.1} parent=11 // pred_fallthru
          _
        // Predicated region
        $region25: #{tpu_custom_call.1} parent=11 // pred_check
          %p278 = pneg %p187
        $region26: #{tpu_custom_call.1} parent=11 // pred_check_branch
          %280 = sbr.rel (%p278) target = $region28
        $region27: #{tpu_custom_call.1} parent=11 // pred_region
          %s282 = ssub.s32 512, 512
          %283 = vsyncadd [#allocation12], %s282
          %s284 = sshll.u32 [#allocation11], 4
          %s285 = int_to_ptr.vmem [resolvable:$true] %s284
          %290 = dma.hbm_to_vmem [thread:$0]  %s6, 512, %s285, [#allocation12], 128, 128, 8
        $region28: #{tpu_custom_call.1} parent=11 // pred_fallthru
          _
        // Predicated region
        $region29: #{tpu_custom_call.1} parent=11 // pred_check
          %p291 = pneg %p208
        $region30: #{tpu_custom_call.1} parent=11 // pred_check_branch
          %293 = sbr.rel (%p291) target = $region32
        $region31: #{tpu_custom_call.1} parent=11 // pred_region
          _
        $region32: #{tpu_custom_call.1} parent=11 // pred_fallthru
          _
      $region12: #{tpu_custom_call.1} parent=5 // pred_fallthru
        _
      %p294 = scmp.lt.s32.totalorder %s25, 2
      // Predicated region
      $region33: #{tpu_custom_call.1} parent=5 // pred_check
        %p295 = pneg %p294
      $region34: #{tpu_custom_call.1} parent=5 // pred_check_branch
        %297 = sbr.rel (%p295) target = $region36
      $region35: #{tpu_custom_call.1} parent=5 // pred_region
        // Predicated region
        $region37: #{tpu_custom_call.1} parent=35 // pred_check
          %p298 = pneg %p45
        $region38: #{tpu_custom_call.1} parent=35 // pred_check_branch
          %300 = sbr.rel (%p298) target = $region40
        $region39: #{tpu_custom_call.1} parent=35 // pred_region
          %s301 = sand.u32 %s35, 1
          %s302 = scalar_lea.sflag [#allocation3], %s301
          %s303 = sand.u32 %s35, 1
          %s304 = smul.addr %s303, 8
          %s305 = scalar_lea.vmem [#allocation2], %s304
          %s307 = ssub.s32 128, 128
          %308 = vsyncadd %s302, %s307
          %s309 = smul.addr %s25, 128
          %s310 = scalar_lea.hbm %s0, %s309
          %s312 = sshll.u32 %s305, 4
          %s313 = int_to_ptr.vmem [resolvable:$true] %s312
          %315 = dma.hbm_to_vmem [thread:$0]  %s310, 128, %s313, %s302
        $region40: #{tpu_custom_call.1} parent=35 // pred_fallthru
          _
        // Predicated region
        $region41: #{tpu_custom_call.1} parent=35 // pred_check
          %p316 = pneg %p71
        $region42: #{tpu_custom_call.1} parent=35 // pred_check_branch
          %318 = sbr.rel (%p316) target = $region44
        $region43: #{tpu_custom_call.1} parent=35 // pred_region
          %s319 = sand.u32 %s25, 1
          %s320 = scalar_lea.sflag [#allocation6], %s319
          %s321 = sand.u32 %s61, 1
          %s322 = smul.addr %s321, 64
          %s323 = scalar_lea.vmem [#allocation5], %s322
          %s324 = smul.u32 8, %s25
          %s326 = ssub.s32 1024, 1024
          %327 = vsyncadd %s320, %s326
          %s328 = smul.addr %s324, 2
          %s329 = smul.addr %s328, 64
          %s330 = scalar_lea.hbm %s1, %s329
          %s331 = sshll.u32 %s323, 4
          %s332 = int_to_ptr.vmem [resolvable:$true] %s331
          %337 = dma.hbm_to_vmem [thread:$0]  %s330, 1024, %s332, %s320, 64, 64, 4
        $region44: #{tpu_custom_call.1} parent=35 // pred_fallthru
          _
        // Predicated region
        $region45: #{tpu_custom_call.1} parent=35 // pred_check
          %p338 = pneg %p97
        $region46: #{tpu_custom_call.1} parent=35 // pred_check_branch
          %340 = sbr.rel (%p338) target = $region48
        $region47: #{tpu_custom_call.1} parent=35 // pred_region
          %s341 = sand.u32 %s25, 1
          %s342 = scalar_lea.sflag [#allocation6], %s341
          %s343 = sand.u32 %s87, 1
          %s344 = smul.addr %s343, 8
          %s345 = scalar_lea.vmem [#allocation7], %s344
          %s347 = ssub.s32 128, 128
          %348 = vsyncadd %s342, %s347
          %s349 = smul.addr %s25, 128
          %s350 = scalar_lea.hbm %s2, %s349
          %s352 = sshll.u32 %s345, 4
          %s353 = int_to_ptr.vmem [resolvable:$true] %s352
          %355 = dma.hbm_to_vmem [thread:$0]  %s350, 128, %s353, %s342
        $region48: #{tpu_custom_call.1} parent=35 // pred_fallthru
          _
      $region36: #{tpu_custom_call.1} parent=5 // pred_fallthru
        _
      %p356 = scmp.le.s32.totalorder 1, %s25
      %p357 = scmp.lt.s32.totalorder %s25, 3
      %p358 = pnand %p356, %p357
      %p359 = pneg %p358
      // Predicated region
      $region49: #{tpu_custom_call.1} parent=5 // pred_check
        _
      $region50: #{tpu_custom_call.1} parent=5 // pred_check_branch
        %361 = sbr.rel (%p358) target = $region52
      $region51: #{tpu_custom_call.1} parent=5 // pred_region
        %s362 = ssub.s32 %s25, 1
        %s363 = sand.u32 %s38, 1
        %s364 = scalar_lea.sflag [#allocation3], %s363
        %s365 = sand.u32 %s38, 1
        %s366 = smul.addr %s365, 8
        %s367 = scalar_lea.vmem [#allocation2], %s366
        // Predicated region
        $region53: #{tpu_custom_call.1} parent=51 // pred_check
          %p368 = pneg %p51
        $region54: #{tpu_custom_call.1} parent=51 // pred_check_branch
          %370 = sbr.rel (%p368) target = $region56
        $region55: #{tpu_custom_call.1} parent=51 // pred_region
          %371 = dma.done %s364, 128
        $region56: #{tpu_custom_call.1} parent=51 // pred_fallthru
          _
        %s372 = sand.u32 %s30, 1
        %s373 = scalar_lea.sflag [#allocation6], %s372
        %s374 = sand.u32 %s64, 1
        %s375 = smul.addr %s374, 64
        %s376 = scalar_lea.vmem [#allocation5], %s375
        // Predicated region
        $region57: #{tpu_custom_call.1} parent=51 // pred_check
          %p377 = pneg %p77
        $region58: #{tpu_custom_call.1} parent=51 // pred_check_branch
          %379 = sbr.rel (%p377) target = $region60
        $region59: #{tpu_custom_call.1} parent=51 // pred_region
          %380 = dma.done %s373, 1024
        $region60: #{tpu_custom_call.1} parent=51 // pred_fallthru
          _
        %s381 = sand.u32 %s30, 1
        %s382 = scalar_lea.sflag [#allocation6], %s381
        %s383 = sand.u32 %s90, 1
        %s384 = smul.addr %s383, 8
        %s385 = scalar_lea.vmem [#allocation7], %s384
        // Predicated region
        $region61: #{tpu_custom_call.1} parent=51 // pred_check
          %p386 = pneg %p103
        $region62: #{tpu_custom_call.1} parent=51 // pred_check_branch
          %388 = sbr.rel (%p386) target = $region64
        $region63: #{tpu_custom_call.1} parent=51 // pred_region
          %389 = dma.done %s382, 128
        $region64: #{tpu_custom_call.1} parent=51 // pred_fallthru
          _
        // Predicated region
        $region65: #{tpu_custom_call.1} parent=51 // pred_check
          %p390 = pneg %p124
        $region66: #{tpu_custom_call.1} parent=51 // pred_check_branch
          %392 = sbr.rel (%p390) target = $region68
        $region67: #{tpu_custom_call.1} parent=51 // pred_region
          %393 = dma.done [#allocation9], 512
        $region68: #{tpu_custom_call.1} parent=51 // pred_fallthru
          _
        // Predicated region
        $region69: #{tpu_custom_call.1} parent=51 // pred_check
          %p394 = pneg %p166
        $region70: #{tpu_custom_call.1} parent=51 // pred_check_branch
          %396 = sbr.rel (%p394) target = $region72
        $region71: #{tpu_custom_call.1} parent=51 // pred_region
          %397 = dma.done [#allocation9], 512
        $region72: #{tpu_custom_call.1} parent=51 // pred_fallthru
          _
        // Predicated region
        $region73: #{tpu_custom_call.1} parent=51 // pred_check
          %p398 = pneg %p187
        $region74: #{tpu_custom_call.1} parent=51 // pred_check_branch
          %400 = sbr.rel (%p398) target = $region76
        $region75: #{tpu_custom_call.1} parent=51 // pred_region
          %401 = dma.done [#allocation12], 512
        $region76: #{tpu_custom_call.1} parent=51 // pred_fallthru
          _
        %s402 = sand.u32 %s38, 1
        %s403 = scalar_lea.sflag [#allocation3], %s402
        %s404 = sand.u32 %s38, 1
        %s405 = smul.addr %s404, 8
        %s406 = scalar_lea.vmem [#allocation2], %s405
        %p407 = pneg %p51
        %p408 = pneg %p48
        %s409 = sand.u32 %s30, 1
        %s410 = scalar_lea.sflag [#allocation6], %s409
        %s411 = sand.u32 %s64, 1
        %s412 = smul.addr %s411, 64
        %s413 = scalar_lea.vmem [#allocation5], %s412
        %p414 = pneg %p77
        %p415 = pneg %p74
        %s416 = sand.u32 %s30, 1
        %s417 = scalar_lea.sflag [#allocation6], %s416
        %s418 = sand.u32 %s90, 1
        %s419 = smul.addr %s418, 8
        %s420 = scalar_lea.vmem [#allocation7], %s419
        %p421 = pneg %p103
        %p422 = pneg %p100
        %p423 = pneg %p124
        %p424 = pneg %p121
        %p425 = pneg %p145
        %p426 = pneg %p142
        %p427 = pneg %p166
        %p428 = pneg %p163
        %p429 = pneg %p187
        %p430 = pneg %p184
        %p431 = pneg %p208
        %p432 = pneg %p205
        %p433 = pneg %p234
        %p434 = pneg %p231
        %s435 = sand.u32 %s221, 1
        %s436 = scalar_lea.sflag [#allocation4], %s435
        %s437 = sand.u32 %s221, 1
        %s438 = smul.addr %s437, 8
        %s439 = scalar_lea.vmem [#allocation13], %s438
        %s440 = smul.u32 8, %s30
        %v441 = vld [vmem:[%s376] sm:$0xf]
        %v442 = vld [vmem:[%s376 + $0x4] sm:$0xf]
        %v443 = vld [vmem:[%s376 + $0x8] sm:$0xf]
        %v444 = vld [vmem:[%s376 + $0xc] sm:$0xf]
        %v445 = vld [vmem:[%s376 + $0x10] sm:$0xf]
        %v446 = vld [vmem:[%s376 + $0x14] sm:$0xf]
        %v447 = vld [vmem:[%s376 + $0x18] sm:$0xf]
        %v448 = vld [vmem:[%s376 + $0x1c] sm:$0xf]
        %v449 = vld [vmem:[%s376 + $0x20] sm:$0xf]
        %v450 = vld [vmem:[%s376 + $0x24] sm:$0xf]
        %v451 = vld [vmem:[%s376 + $0x28] sm:$0xf]
        %v452 = vld [vmem:[%s376 + $0x2c] sm:$0xf]
        %v453 = vld [vmem:[%s376 + $0x30] sm:$0xf]
        %v454 = vld [vmem:[%s376 + $0x34] sm:$0xf]
        %v455 = vld [vmem:[%s376 + $0x38] sm:$0xf]
        %v456 = vld [vmem:[%s376 + $0x3c] sm:$0xf]
        %v457 = vld [vmem:[%s367] sm:$0xff]
        %v458 = vld [vmem:[%s385] sm:$0xff]
        %v459 = vld [vmem:[#allocation8] sm:$0xff]
        %v460 = vld [vmem:[#allocation8 + $0x8] sm:$0xff]
        %v461 = vld [vmem:[#allocation8 + $0x10] sm:$0xff]
        %v462 = vld [vmem:[#allocation8 + $0x18] sm:$0xff]
        %v463 = vld [vmem:[%s4] sm:$0x1]
        %v465 = vlaneseq
        %v466 = vshrl.u32 %v465, 7
        %v467 = vsub.s32 0, %v466
        %v468 = vrot.slane %v463, %v467
        %vm470 = vcmask 261120
        %v472 = vsel %vm470, %v457, 0
        %474 = vmatprep.subr.mxu0 0.0
        %475 = vmatpush1.msra.mxu0 0.0
        %476 = vmatprep.subr.mxu0 0.0
        %477 = vmatpush1.msra.mxu0 0.0
        %478 = vmatprep.subr.mxu0 0.0
        %479 = vmatpush1.msra.mxu0 0.0
        %480 = vmatprep.subr.mxu0 0.0
        %481 = vmatpush1.msra.mxu0 0.0
        %482 = vmatprep.subr.mxu0 0.0
        %483 = vmatpush1.msra.mxu0 0.0
        %484 = vmatprep.subr.mxu0 0.0
        %485 = vmatpush1.msra.mxu0 0.0
        %486 = vmatprep.subr.mxu0 0.0
        %487 = vmatpush1.msra.mxu0 0.0
        %488 = vmatprep.subr.mxu0 0.0
        %489 = vmatpush1.msra.mxu0 0.0
        %490 = vmatprep.subr.mxu0 0.0
        %491 = vmatpush1.msra.mxu0 0.0
        %492 = vmatprep.subr.mxu0 0.0
        %493 = vmatpush1.msra.mxu0 0.0
        %494 = vmatprep.subr.mxu0 0.0
        %495 = vmatpush1.msra.mxu0 0.0
        %496 = vmatprep.subr.mxu0 0.0
        %497 = vmatpush1.msra.mxu0 0.0
        %498 = vmatprep.subr.mxu0 0.0
        %499 = vmatpush1.msra.mxu0 %v462
        %500 = vmatprep.subr.mxu0 0.0
        %501 = vmatpush1.msra.mxu0 %v461
        %502 = vmatprep.subr.mxu0 0.0
        %503 = vmatpush1.msra.mxu0 %v460
        %504 = vmatprep.subr.mxu0 0.0
        %505 = vmatpush1.msra.mxu0 %v459
        %506 = vmatprep.subr.mxu0 0.0
        %507 = vmatpush2.msra.mxu0 0.0
        %508 = vmatprep.subr.mxu0 0.0
        %509 = vmatpush2.msra.mxu0 0.0
        %510 = vmatprep.subr.mxu0 0.0
        %511 = vmatpush2.msra.mxu0 0.0
        %512 = vmatprep.subr.mxu0 0.0
        %513 = vmatpush2.msra.mxu0 0.0
        %514 = vmatprep.subr.mxu0 0.0
        %515 = vmatpush2.msra.mxu0 0.0
        %516 = vmatprep.subr.mxu0 0.0
        %517 = vmatpush2.msra.mxu0 0.0
        %518 = vmatprep.subr.mxu0 0.0
        %519 = vmatpush2.msra.mxu0 0.0
        %520 = vmatprep.subr.mxu0 0.0
        %521 = vmatpush2.msra.mxu0 0.0
        %522 = vmatprep.subr.mxu0 0.0
        %523 = vmatpush2.msra.mxu0 0.0
        %524 = vmatprep.subr.mxu0 0.0
        %525 = vmatpush2.msra.mxu0 0.0
        %526 = vmatprep.subr.mxu0 0.0
        %527 = vmatpush2.msra.mxu0 0.0
        %528 = vmatprep.subr.mxu0 0.0
        %529 = vmatpush2.msra.mxu0 0.0
        %530 = vmatprep.subr.mxu0 0.0
        %531 = vmatpush2.msra.mxu0 0.0
        %532 = vmatprep.subr.mxu0 0.0
        %533 = vmatpush2.msra.mxu0 0.0
        %534 = vmatprep.subr.mxu0 0.0
        %535 = vmatpush2.msra.mxu0 0.0
        %536 = vmatprep.subr.mxu0 0.0
        %537 = vmatpush2.msra.mxu0 0.0
        %538 = vmatprep.mubr.f32.mxu0 0.0
        %539 = vmatmul.mubr.f32.gmra.mxu0 %v472
        %v540 = vpop.f32.mrf.mxu0
        %v541 = vadd.f32 %v468, %v540
        %v542 = vpop.f32.mrf.mxu0
        %543 = vdwg.mxu0
        %v544 = vld [vmem:[%s7] sm:$0x1]
        %v546 = vlaneseq
        %v547 = vshrl.u32 %v546, 7
        %v548 = vsub.s32 0, %v547
        %v549 = vrot.slane %v544, %v548
        %v551 = vmul.f32 %v458, %v549
        %v552 = vld [vmem:[#allocation10] sm:$0xff]
        %v553 = vld [vmem:[#allocation10 + $0x8] sm:$0xff]
        %v554 = vld [vmem:[#allocation10 + $0x10] sm:$0xff]
        %v555 = vld [vmem:[#allocation10 + $0x18] sm:$0xff]
        %v557 = vsel %vm470, %v551, 0
        %559 = vmatprep.subr.mxu0 0.0
        %560 = vmatpush1.msra.mxu0 0.0
        %561 = vmatprep.subr.mxu0 0.0
        %562 = vmatpush1.msra.mxu0 0.0
        %563 = vmatprep.subr.mxu0 0.0
        %564 = vmatpush1.msra.mxu0 0.0
        %565 = vmatprep.subr.mxu0 0.0
        %566 = vmatpush1.msra.mxu0 0.0
        %567 = vmatprep.subr.mxu0 0.0
        %568 = vmatpush1.msra.mxu0 0.0
        %569 = vmatprep.subr.mxu0 0.0
        %570 = vmatpush1.msra.mxu0 0.0
        %571 = vmatprep.subr.mxu0 0.0
        %572 = vmatpush1.msra.mxu0 0.0
        %573 = vmatprep.subr.mxu0 0.0
        %574 = vmatpush1.msra.mxu0 0.0
        %575 = vmatprep.subr.mxu0 0.0
        %576 = vmatpush1.msra.mxu0 0.0
        %577 = vmatprep.subr.mxu0 0.0
        %578 = vmatpush1.msra.mxu0 0.0
        %579 = vmatprep.subr.mxu0 0.0
        %580 = vmatpush1.msra.mxu0 0.0
        %581 = vmatprep.subr.mxu0 0.0
        %582 = vmatpush1.msra.mxu0 0.0
        %583 = vmatprep.subr.mxu0 0.0
        %584 = vmatpush1.msra.mxu0 %v555
        %585 = vmatprep.subr.mxu0 0.0
        %586 = vmatpush1.msra.mxu0 %v554
        %587 = vmatprep.subr.mxu0 0.0
        %588 = vmatpush1.msra.mxu0 %v553
        %589 = vmatprep.subr.mxu0 0.0
        %590 = vmatpush1.msra.mxu0 %v552
        %591 = vmatprep.subr.mxu0 0.0
        %592 = vmatpush2.msra.mxu0 0.0
        %593 = vmatprep.subr.mxu0 0.0
        %594 = vmatpush2.msra.mxu0 0.0
        %595 = vmatprep.subr.mxu0 0.0
        %596 = vmatpush2.msra.mxu0 0.0
        %597 = vmatprep.subr.mxu0 0.0
        %598 = vmatpush2.msra.mxu0 0.0
        %599 = vmatprep.subr.mxu0 0.0
        %600 = vmatpush2.msra.mxu0 0.0
        %601 = vmatprep.subr.mxu0 0.0
        %602 = vmatpush2.msra.mxu0 0.0
        %603 = vmatprep.subr.mxu0 0.0
        %604 = vmatpush2.msra.mxu0 0.0
        %605 = vmatprep.subr.mxu0 0.0
        %606 = vmatpush2.msra.mxu0 0.0
        %607 = vmatprep.subr.mxu0 0.0
        %608 = vmatpush2.msra.mxu0 0.0
        %609 = vmatprep.subr.mxu0 0.0
        %610 = vmatpush2.msra.mxu0 0.0
        %611 = vmatprep.subr.mxu0 0.0
        %612 = vmatpush2.msra.mxu0 0.0
        %613 = vmatprep.subr.mxu0 0.0
        %614 = vmatpush2.msra.mxu0 0.0
        %615 = vmatprep.subr.mxu0 0.0
        %616 = vmatpush2.msra.mxu0 0.0
        %617 = vmatprep.subr.mxu0 0.0
        %618 = vmatpush2.msra.mxu0 0.0
        %619 = vmatprep.subr.mxu0 0.0
        %620 = vmatpush2.msra.mxu0 0.0
        %621 = vmatprep.subr.mxu0 0.0
        %622 = vmatpush2.msra.mxu0 0.0
        %623 = vmatprep.mubr.f32.mxu0 0.0
        %624 = vmatmul.mubr.f32.gmra.mxu0 %v557
        %v625 = vpop.f32.mrf.mxu0
        %v626 = vadd.f32 0.0, %v625
        %v627 = vpop.f32.mrf.mxu0
        %628 = vdwg.mxu0
        %v629 = vld [vmem:[#allocation11] sm:$0xff]
        %v630 = vld [vmem:[#allocation11 + $0x8] sm:$0xff]
        %v631 = vld [vmem:[#allocation11 + $0x10] sm:$0xff]
        %v632 = vld [vmem:[#allocation11 + $0x18] sm:$0xff]
        %633 = vmatprep.subr.mxu0 0.0
        %634 = vmatpush1.msra.mxu0 0.0
        %635 = vmatprep.subr.mxu0 0.0
        %636 = vmatpush1.msra.mxu0 0.0
        %637 = vmatprep.subr.mxu0 0.0
        %638 = vmatpush1.msra.mxu0 0.0
        %639 = vmatprep.subr.mxu0 0.0
        %640 = vmatpush1.msra.mxu0 0.0
        %641 = vmatprep.subr.mxu0 0.0
        %642 = vmatpush1.msra.mxu0 0.0
        %643 = vmatprep.subr.mxu0 0.0
        %644 = vmatpush1.msra.mxu0 0.0
        %645 = vmatprep.subr.mxu0 0.0
        %646 = vmatpush1.msra.mxu0 0.0
        %647 = vmatprep.subr.mxu0 0.0
        %648 = vmatpush1.msra.mxu0 0.0
        %649 = vmatprep.subr.mxu0 0.0
        %650 = vmatpush1.msra.mxu0 0.0
        %651 = vmatprep.subr.mxu0 0.0
        %652 = vmatpush1.msra.mxu0 0.0
        %653 = vmatprep.subr.mxu0 0.0
        %654 = vmatpush1.msra.mxu0 0.0
        %655 = vmatprep.subr.mxu0 0.0
        %656 = vmatpush1.msra.mxu0 0.0
        %657 = vmatprep.subr.mxu0 0.0
        %658 = vmatpush1.msra.mxu0 %v632
        %659 = vmatprep.subr.mxu0 0.0
        %660 = vmatpush1.msra.mxu0 %v631
        %661 = vmatprep.subr.mxu0 0.0
        %662 = vmatpush1.msra.mxu0 %v630
        %663 = vmatprep.subr.mxu0 0.0
        %664 = vmatpush1.msra.mxu0 %v629
        %665 = vmatprep.subr.mxu0 0.0
        %666 = vmatpush2.msra.mxu0 0.0
        %667 = vmatprep.subr.mxu0 0.0
        %668 = vmatpush2.msra.mxu0 0.0
        %669 = vmatprep.subr.mxu0 0.0
        %670 = vmatpush2.msra.mxu0 0.0
        %671 = vmatprep.subr.mxu0 0.0
        %672 = vmatpush2.msra.mxu0 0.0
        %673 = vmatprep.subr.mxu0 0.0
        %674 = vmatpush2.msra.mxu0 0.0
        %675 = vmatprep.subr.mxu0 0.0
        %676 = vmatpush2.msra.mxu0 0.0
        %677 = vmatprep.subr.mxu0 0.0
        %678 = vmatpush2.msra.mxu0 0.0
        %679 = vmatprep.subr.mxu0 0.0
        %680 = vmatpush2.msra.mxu0 0.0
        %681 = vmatprep.subr.mxu0 0.0
        %682 = vmatpush2.msra.mxu0 0.0
        %683 = vmatprep.subr.mxu0 0.0
        %684 = vmatpush2.msra.mxu0 0.0
        %685 = vmatprep.subr.mxu0 0.0
        %686 = vmatpush2.msra.mxu0 0.0
        %687 = vmatprep.subr.mxu0 0.0
        %688 = vmatpush2.msra.mxu0 0.0
        %689 = vmatprep.subr.mxu0 0.0
        %690 = vmatpush2.msra.mxu0 0.0
        %691 = vmatprep.subr.mxu0 0.0
        %692 = vmatpush2.msra.mxu0 0.0
        %693 = vmatprep.subr.mxu0 0.0
        %694 = vmatpush2.msra.mxu0 0.0
        %695 = vmatprep.subr.mxu0 0.0
        %696 = vmatpush2.msra.mxu0 0.0
        %697 = vmatprep.mubr.f32.mxu0 0.0
        %698 = vmatmul.mubr.f32.gmra.mxu0 %v557
        %v699 = vpop.f32.mrf.mxu0
        %v700 = vadd.f32 0.0, %v699
        %v701 = vpop.f32.mrf.mxu0
        %702 = vdwg.mxu0
        %v703 = vmul.f32 %v541, %v626
        %v704 = vadd.f32 %v703, %v700
        %v706 = vcombine.high %v704, %v704
        %v708 = vunpack.c.l.s4 1966171168
        %v709 = vunpack.c.0.s8 %v708
        %v710 = vlaneseq
        %v711 = vshrl.u32 %v710, 7
        %v712 = vsub.s32 %v709, %v711
        %v713 = vrot.slane %v704, %v712
        %v715 = vunpack.c.l.s4 1966171168
        %v716 = vunpack.c.0.s8 %v715
        %v717 = vlaneseq
        %v718 = vshrl.u32 %v717, 7
        %v719 = vsub.s32 %v716, %v718
        %v720 = vrot.slane %v706, %v719
        %v721 = vcombine.high %v713, %v713
        %v722 = vcombine.high %v720, %v720
        %v724 = vunpack.c.l.s4 1966171168
        %v725 = vunpack.c.0.s8 %v724
        %v726 = vlaneseq
        %v727 = vshrl.u32 %v726, 7
        %v728 = vsub.s32 %v725, %v727
        %v729 = vrot.slane %v713, %v728
        %v731 = vunpack.c.l.s4 1966171168
        %v732 = vunpack.c.0.s8 %v731
        %v733 = vlaneseq
        %v734 = vshrl.u32 %v733, 7
        %v735 = vsub.s32 %v732, %v734
        %v736 = vrot.slane %v720, %v735
        %v738 = vunpack.c.l.s4 1966171168
        %v739 = vunpack.c.0.s8 %v738
        %v740 = vlaneseq
        %v741 = vshrl.u32 %v740, 7
        %v742 = vsub.s32 %v739, %v741
        %v743 = vrot.slane %v721, %v742
        %v745 = vunpack.c.l.s4 1966171168
        %v746 = vunpack.c.0.s8 %v745
        %v747 = vlaneseq
        %v748 = vshrl.u32 %v747, 7
        %v749 = vsub.s32 %v746, %v748
        %v750 = vrot.slane %v722, %v749
        %v751 = vcombine.high %v729, %v729
        %v752 = vcombine.high %v736, %v736
        %v753 = vcombine.high %v743, %v743
        %v754 = vcombine.high %v750, %v750
        %v755 = vunpack.c.l.bf16 %v441
        %v756 = vunpack.c.l.bf16 %v442
        %v757 = vunpack.c.l.bf16 %v443
        %v758 = vunpack.c.l.bf16 %v444
        %v759 = vunpack.c.l.bf16 %v445
        %v760 = vunpack.c.l.bf16 %v446
        %v761 = vunpack.c.l.bf16 %v447
        %v762 = vunpack.c.l.bf16 %v448
        %v763 = vunpack.c.l.bf16 %v449
        %v764 = vunpack.c.l.bf16 %v450
        %v765 = vunpack.c.l.bf16 %v451
        %v766 = vunpack.c.l.bf16 %v452
        %v767 = vunpack.c.l.bf16 %v453
        %v768 = vunpack.c.l.bf16 %v454
        %v769 = vunpack.c.l.bf16 %v455
        %v770 = vunpack.c.l.bf16 %v456
        %v771 = vlaneseq
        %v772 = vshrl.u32 %v771, 7
        %v773 = vsub.s32 0, %v772
        %v774 = vrot.slane %v729, %v773
        %v775 = vlaneseq
        %v776 = vshrl.u32 %v775, 7
        %v777 = vsub.s32 0, %v776
        %v778 = vrot.slane %v743, %v777
        %v779 = vlaneseq
        %v780 = vshrl.u32 %v779, 7
        %v781 = vsub.s32 0, %v780
        %v782 = vrot.slane %v751, %v781
        %v783 = vlaneseq
        %v784 = vshrl.u32 %v783, 7
        %v785 = vsub.s32 0, %v784
        %v786 = vrot.slane %v753, %v785
        %v787 = vlaneseq
        %v788 = vshrl.u32 %v787, 7
        %v789 = vsub.s32 0, %v788
        %v790 = vrot.slane %v736, %v789
        %v791 = vlaneseq
        %v792 = vshrl.u32 %v791, 7
        %v793 = vsub.s32 0, %v792
        %v794 = vrot.slane %v750, %v793
        %v795 = vlaneseq
        %v796 = vshrl.u32 %v795, 7
        %v797 = vsub.s32 0, %v796
        %v798 = vrot.slane %v752, %v797
        %v799 = vlaneseq
        %v800 = vshrl.u32 %v799, 7
        %v801 = vsub.s32 0, %v800
        %v802 = vrot.slane %v754, %v801
        %v811 = vmul.f32 %v755, %v774
        %v812 = vmul.f32 %v756, %v774
        %v813 = vmul.f32 %v757, %v778
        %v814 = vmul.f32 %v758, %v778
        %v815 = vmul.f32 %v759, %v782
        %v816 = vmul.f32 %v760, %v782
        %v817 = vmul.f32 %v761, %v786
        %v818 = vmul.f32 %v762, %v786
        %v819 = vmul.f32 %v763, %v790
        %v820 = vmul.f32 %v764, %v790
        %v821 = vmul.f32 %v765, %v794
        %v822 = vmul.f32 %v766, %v794
        %v823 = vmul.f32 %v767, %v798
        %v824 = vmul.f32 %v768, %v798
        %v825 = vmul.f32 %v769, %v802
        %v826 = vmul.f32 %v770, %v802
        %v827 = vsel %vm470, %v811, 0.0
        %828 = vadd.xlane.f32.xlu0 %v827
        %v829 = vpop.xlane.xlu0 %828
        %v830 = vsel %vm470, %v812, 0.0
        %831 = vadd.xlane.f32.xlu0 %v830
        %v832 = vpop.xlane.xlu0 %831
        %v833 = vsel %vm470, %v813, 0.0
        %834 = vadd.xlane.f32.xlu0 %v833
        %v835 = vpop.xlane.xlu0 %834
        %v836 = vsel %vm470, %v814, 0.0
        %837 = vadd.xlane.f32.xlu0 %v836
        %v838 = vpop.xlane.xlu0 %837
        %v839 = vsel %vm470, %v815, 0.0
        %840 = vadd.xlane.f32.xlu0 %v839
        %v841 = vpop.xlane.xlu0 %840
        %v842 = vsel %vm470, %v816, 0.0
        %843 = vadd.xlane.f32.xlu0 %v842
        %v844 = vpop.xlane.xlu0 %843
        %v845 = vsel %vm470, %v817, 0.0
        %846 = vadd.xlane.f32.xlu0 %v845
        %v847 = vpop.xlane.xlu0 %846
        %v848 = vsel %vm470, %v818, 0.0
        %849 = vadd.xlane.f32.xlu0 %v848
        %v850 = vpop.xlane.xlu0 %849
        %v851 = vsel %vm470, %v819, 0.0
        %852 = vadd.xlane.f32.xlu0 %v851
        %v853 = vpop.xlane.xlu0 %852
        %v854 = vsel %vm470, %v820, 0.0
        %855 = vadd.xlane.f32.xlu0 %v854
        %v856 = vpop.xlane.xlu0 %855
        %v857 = vsel %vm470, %v821, 0.0
        %858 = vadd.xlane.f32.xlu0 %v857
        %v859 = vpop.xlane.xlu0 %858
        %v860 = vsel %vm470, %v822, 0.0
        %861 = vadd.xlane.f32.xlu0 %v860
        %v862 = vpop.xlane.xlu0 %861
        %v863 = vsel %vm470, %v823, 0.0
        %864 = vadd.xlane.f32.xlu0 %v863
        %v865 = vpop.xlane.xlu0 %864
        %v866 = vsel %vm470, %v824, 0.0
        %867 = vadd.xlane.f32.xlu0 %v866
        %v868 = vpop.xlane.xlu0 %867
        %v869 = vsel %vm470, %v825, 0.0
        %870 = vadd.xlane.f32.xlu0 %v869
        %v871 = vpop.xlane.xlu0 %870
        %v872 = vsel %vm470, %v826, 0.0
        %873 = vadd.xlane.f32.xlu0 %v872
        %v874 = vpop.xlane.xlu0 %873
        %v891 = vlaneseq
        %v892 = vand.u32 %v891, 127
        %v893 = vlaneseq
        %v894 = vshrl.u32 %v893, 7
        %v895 = vsub.s32 %v892, %v894
        %v896 = vrot.slane %v829, %v895
        %v897 = vadd.s32 %v892, 4294967288
        %v898 = vlaneseq
        %v899 = vshrl.u32 %v898, 7
        %v900 = vsub.s32 %v897, %v899
        %v901 = vrot.slane %v832, %v900
        %vm902 = vcmask 130112
        %v903 = vsel %vm902, %v901, %v896
        %v904 = vlaneseq
        %v905 = vshrl.u32 %v904, 7
        %v906 = vsub.s32 %v892, %v905
        %v907 = vrot.slane %v835, %v906
        %v908 = vlaneseq
        %v909 = vshrl.u32 %v908, 7
        %v910 = vsub.s32 %v897, %v909
        %v911 = vrot.slane %v838, %v910
        %v912 = vsel %vm902, %v911, %v907
        %v913 = vlaneseq
        %v914 = vshrl.u32 %v913, 7
        %v915 = vsub.s32 %v892, %v914
        %v916 = vrot.slane %v841, %v915
        %v917 = vlaneseq
        %v918 = vshrl.u32 %v917, 7
        %v919 = vsub.s32 %v897, %v918
        %v920 = vrot.slane %v844, %v919
        %v921 = vsel %vm902, %v920, %v916
        %v922 = vlaneseq
        %v923 = vshrl.u32 %v922, 7
        %v924 = vsub.s32 %v892, %v923
        %v925 = vrot.slane %v847, %v924
        %v926 = vlaneseq
        %v927 = vshrl.u32 %v926, 7
        %v928 = vsub.s32 %v897, %v927
        %v929 = vrot.slane %v850, %v928
        %v930 = vsel %vm902, %v929, %v925
        %v931 = vlaneseq
        %v932 = vshrl.u32 %v931, 7
        %v933 = vsub.s32 %v892, %v932
        %v934 = vrot.slane %v853, %v933
        %v935 = vlaneseq
        %v936 = vshrl.u32 %v935, 7
        %v937 = vsub.s32 %v897, %v936
        %v938 = vrot.slane %v856, %v937
        %v939 = vsel %vm902, %v938, %v934
        %v940 = vlaneseq
        %v941 = vshrl.u32 %v940, 7
        %v942 = vsub.s32 %v892, %v941
        %v943 = vrot.slane %v859, %v942
        %v944 = vlaneseq
        %v945 = vshrl.u32 %v944, 7
        %v946 = vsub.s32 %v897, %v945
        %v947 = vrot.slane %v862, %v946
        %v948 = vsel %vm902, %v947, %v943
        %v949 = vlaneseq
        %v950 = vshrl.u32 %v949, 7
        %v951 = vsub.s32 %v892, %v950
        %v952 = vrot.slane %v865, %v951
        %v953 = vlaneseq
        %v954 = vshrl.u32 %v953, 7
        %v955 = vsub.s32 %v897, %v954
        %v956 = vrot.slane %v868, %v955
        %v957 = vsel %vm902, %v956, %v952
        %v958 = vlaneseq
        %v959 = vshrl.u32 %v958, 7
        %v960 = vsub.s32 %v892, %v959
        %v961 = vrot.slane %v871, %v960
        %v962 = vlaneseq
        %v963 = vshrl.u32 %v962, 7
        %v964 = vsub.s32 %v897, %v963
        %v965 = vrot.slane %v874, %v964
        %v966 = vsel %vm902, %v965, %v961
        %vm967 = vcmask 1041409
        %v968 = vsel %vm967, %v912, %v903
        %vm969 = vcmask 1042434
        %v970 = vsel %vm969, %v921, %v968
        %vm971 = vcmask 1043459
        %v972 = vsel %vm971, %v930, %v970
        %vm973 = vcmask 1044484
        %v974 = vsel %vm973, %v939, %v972
        %vm975 = vcmask 1045509
        %v976 = vsel %vm975, %v948, %v974
        %vm977 = vcmask 1046534
        %v978 = vsel %vm977, %v957, %v976
        %vm979 = vcmask 1047559
        %v980 = vsel %vm979, %v966, %v978
        %vm982 = vcmask 130048
        %v983 = vsel %vm982, %v980, -inf
        %984 = vmax.xlane.f32.xlu0 %v983
        %v985 = vpop.xlane.xlu0 %984
        %v987 = vlaneseq
        %v988 = vshrl.u32 %v987, 7
        %v989 = vsub.s32 0, %v988
        %v990 = vrot.slane %v985, %v989
        %v991 = vlaneseq
        %v992 = vshrl.u32 %v991, 7
        %v993 = vsub.s32 1, %v992
        %v994 = vrot.slane %v985, %v993
        %v995 = vlaneseq
        %v996 = vshrl.u32 %v995, 7
        %v997 = vsub.s32 2, %v996
        %v998 = vrot.slane %v985, %v997
        %v999 = vlaneseq
        %v1000 = vshrl.u32 %v999, 7
        %v1001 = vsub.s32 3, %v1000
        %v1002 = vrot.slane %v985, %v1001
        %v1003 = vlaneseq
        %v1004 = vshrl.u32 %v1003, 7
        %v1005 = vsub.s32 4, %v1004
        %v1006 = vrot.slane %v985, %v1005
        %v1007 = vlaneseq
        %v1008 = vshrl.u32 %v1007, 7
        %v1009 = vsub.s32 5, %v1008
        %v1010 = vrot.slane %v985, %v1009
        %v1011 = vlaneseq
        %v1012 = vshrl.u32 %v1011, 7
        %v1013 = vsub.s32 6, %v1012
        %v1014 = vrot.slane %v985, %v1013
        %v1015 = vlaneseq
        %v1016 = vshrl.u32 %v1015, 7
        %v1017 = vsub.s32 7, %v1016
        %v1018 = vrot.slane %v985, %v1017
        %v1027 = vsub.f32 %v829, %v990
        %v1028 = vsub.f32 %v832, %v990
        %v1029 = vsub.f32 %v835, %v994
        %v1030 = vsub.f32 %v838, %v994
        %v1031 = vsub.f32 %v841, %v998
        %v1032 = vsub.f32 %v844, %v998
        %v1033 = vsub.f32 %v847, %v1002
        %v1034 = vsub.f32 %v850, %v1002
        %v1035 = vsub.f32 %v853, %v1006
        %v1036 = vsub.f32 %v856, %v1006
        %v1037 = vsub.f32 %v859, %v1010
        %v1038 = vsub.f32 %v862, %v1010
        %v1039 = vsub.f32 %v865, %v1014
        %v1040 = vsub.f32 %v868, %v1014
        %v1041 = vsub.f32 %v871, %v1018
        %v1042 = vsub.f32 %v874, %v1018
        %v1043 = vmul.f32 %v1027, 1.442695
        %v1044 = vpow.pop %v1043
        %v1045 = vmul.f32 %v1028, 1.442695
        %v1046 = vpow.pop %v1045
        %v1047 = vmul.f32 %v1029, 1.442695
        %v1048 = vpow.pop %v1047
        %v1049 = vmul.f32 %v1030, 1.442695
        %v1050 = vpow.pop %v1049
        %v1051 = vmul.f32 %v1031, 1.442695
        %v1052 = vpow.pop %v1051
        %v1053 = vmul.f32 %v1032, 1.442695
        %v1054 = vpow.pop %v1053
        %v1055 = vmul.f32 %v1033, 1.442695
        %v1056 = vpow.pop %v1055
        %v1057 = vmul.f32 %v1034, 1.442695
        %v1058 = vpow.pop %v1057
        %v1059 = vmul.f32 %v1035, 1.442695
        %v1060 = vpow.pop %v1059
        %v1061 = vmul.f32 %v1036, 1.442695
        %v1062 = vpow.pop %v1061
        %v1063 = vmul.f32 %v1037, 1.442695
        %v1064 = vpow.pop %v1063
        %v1065 = vmul.f32 %v1038, 1.442695
        %v1066 = vpow.pop %v1065
        %v1067 = vmul.f32 %v1039, 1.442695
        %v1068 = vpow.pop %v1067
        %v1069 = vmul.f32 %v1040, 1.442695
        %v1070 = vpow.pop %v1069
        %v1071 = vmul.f32 %v1041, 1.442695
        %v1072 = vpow.pop %v1071
        %v1073 = vmul.f32 %v1042, 1.442695
        %v1074 = vpow.pop %v1073
        %1091 = vset.pattern.permute.xlu0 0
        %1092 = vperm.xlu0 %1091, %v1044
        %v1093 = vpop.permute.xlu0 %1092
        %1094 = vset.pattern.permute.xlu0 0
        %1095 = vperm.xlu0 %1094, %v1046
        %v1096 = vpop.permute.xlu0 %1095
        %1097 = vset.pattern.permute.xlu0 0
        %1098 = vperm.xlu0 %1097, %v1048
        %v1099 = vpop.permute.xlu0 %1098
        %1100 = vset.pattern.permute.xlu0 0
        %1101 = vperm.xlu0 %1100, %v1050
        %v1102 = vpop.permute.xlu0 %1101
        %1103 = vset.pattern.permute.xlu0 0
        %1104 = vperm.xlu0 %1103, %v1052
        %v1105 = vpop.permute.xlu0 %1104
        %1106 = vset.pattern.permute.xlu0 0
        %1107 = vperm.xlu0 %1106, %v1054
        %v1108 = vpop.permute.xlu0 %1107
        %1109 = vset.pattern.permute.xlu0 0
        %1110 = vperm.xlu0 %1109, %v1056
        %v1111 = vpop.permute.xlu0 %1110
        %1112 = vset.pattern.permute.xlu0 0
        %1113 = vperm.xlu0 %1112, %v1058
        %v1114 = vpop.permute.xlu0 %1113
        %1115 = vset.pattern.permute.xlu0 0
        %1116 = vperm.xlu0 %1115, %v1060
        %v1117 = vpop.permute.xlu0 %1116
        %1118 = vset.pattern.permute.xlu0 0
        %1119 = vperm.xlu0 %1118, %v1062
        %v1120 = vpop.permute.xlu0 %1119
        %1121 = vset.pattern.permute.xlu0 0
        %1122 = vperm.xlu0 %1121, %v1064
        %v1123 = vpop.permute.xlu0 %1122
        %1124 = vset.pattern.permute.xlu0 0
        %1125 = vperm.xlu0 %1124, %v1066
        %v1126 = vpop.permute.xlu0 %1125
        %1127 = vset.pattern.permute.xlu0 0
        %1128 = vperm.xlu0 %1127, %v1068
        %v1129 = vpop.permute.xlu0 %1128
        %1130 = vset.pattern.permute.xlu0 0
        %1131 = vperm.xlu0 %1130, %v1070
        %v1132 = vpop.permute.xlu0 %1131
        %1133 = vset.pattern.permute.xlu0 0
        %1134 = vperm.xlu0 %1133, %v1072
        %v1135 = vpop.permute.xlu0 %1134
        %1136 = vset.pattern.permute.xlu0 0
        %1137 = vperm.xlu0 %1136, %v1074
        %v1138 = vpop.permute.xlu0 %1137
        %v1139 = vlaneseq
        %v1140 = vshrl.u32 %v1139, 7
        %v1141 = vsub.s32 %v892, %v1140
        %v1142 = vrot.slane %v1093, %v1141
        %v1143 = vlaneseq
        %v1144 = vshrl.u32 %v1143, 7
        %v1145 = vsub.s32 %v897, %v1144
        %v1146 = vrot.slane %v1096, %v1145
        %v1147 = vsel %vm902, %v1146, %v1142
        %v1148 = vlaneseq
        %v1149 = vshrl.u32 %v1148, 7
        %v1150 = vsub.s32 %v892, %v1149
        %v1151 = vrot.slane %v1099, %v1150
        %v1152 = vlaneseq
        %v1153 = vshrl.u32 %v1152, 7
        %v1154 = vsub.s32 %v897, %v1153
        %v1155 = vrot.slane %v1102, %v1154
        %v1156 = vsel %vm902, %v1155, %v1151
        %v1157 = vlaneseq
        %v1158 = vshrl.u32 %v1157, 7
        %v1159 = vsub.s32 %v892, %v1158
        %v1160 = vrot.slane %v1105, %v1159
        %v1161 = vlaneseq
        %v1162 = vshrl.u32 %v1161, 7
        %v1163 = vsub.s32 %v897, %v1162
        %v1164 = vrot.slane %v1108, %v1163
        %v1165 = vsel %vm902, %v1164, %v1160
        %v1166 = vlaneseq
        %v1167 = vshrl.u32 %v1166, 7
        %v1168 = vsub.s32 %v892, %v1167
        %v1169 = vrot.slane %v1111, %v1168
        %v1170 = vlaneseq
        %v1171 = vshrl.u32 %v1170, 7
        %v1172 = vsub.s32 %v897, %v1171
        %v1173 = vrot.slane %v1114, %v1172
        %v1174 = vsel %vm902, %v1173, %v1169
        %v1175 = vlaneseq
        %v1176 = vshrl.u32 %v1175, 7
        %v1177 = vsub.s32 %v892, %v1176
        %v1178 = vrot.slane %v1117, %v1177
        %v1179 = vlaneseq
        %v1180 = vshrl.u32 %v1179, 7
        %v1181 = vsub.s32 %v897, %v1180
        %v1182 = vrot.slane %v1120, %v1181
        %v1183 = vsel %vm902, %v1182, %v1178
        %v1184 = vlaneseq
        %v1185 = vshrl.u32 %v1184, 7
        %v1186 = vsub.s32 %v892, %v1185
        %v1187 = vrot.slane %v1123, %v1186
        %v1188 = vlaneseq
        %v1189 = vshrl.u32 %v1188, 7
        %v1190 = vsub.s32 %v897, %v1189
        %v1191 = vrot.slane %v1126, %v1190
        %v1192 = vsel %vm902, %v1191, %v1187
        %v1193 = vlaneseq
        %v1194 = vshrl.u32 %v1193, 7
        %v1195 = vsub.s32 %v892, %v1194
        %v1196 = vrot.slane %v1129, %v1195
        %v1197 = vlaneseq
        %v1198 = vshrl.u32 %v1197, 7
        %v1199 = vsub.s32 %v897, %v1198
        %v1200 = vrot.slane %v1132, %v1199
        %v1201 = vsel %vm902, %v1200, %v1196
        %v1202 = vlaneseq
        %v1203 = vshrl.u32 %v1202, 7
        %v1204 = vsub.s32 %v892, %v1203
        %v1205 = vrot.slane %v1135, %v1204
        %v1206 = vlaneseq
        %v1207 = vshrl.u32 %v1206, 7
        %v1208 = vsub.s32 %v897, %v1207
        %v1209 = vrot.slane %v1138, %v1208
        %v1210 = vsel %vm902, %v1209, %v1205
        %v1211 = vsel %vm967, %v1156, %v1147
        %v1212 = vsel %vm969, %v1165, %v1211
        %v1213 = vsel %vm971, %v1174, %v1212
        %v1214 = vsel %vm973, %v1183, %v1213
        %v1215 = vsel %vm975, %v1192, %v1214
        %v1216 = vsel %vm977, %v1201, %v1215
        %v1217 = vsel %vm979, %v1210, %v1216
        %v1219 = vsel %vm982, %v1217, 0.0
        %1220 = vadd.xlane.f32.xlu0 %v1219
        %v1221 = vpop.xlane.xlu0 %1220
        %v1223 = vlaneseq
        %v1224 = vshrl.u32 %v1223, 7
        %v1225 = vsub.s32 0, %v1224
        %v1226 = vrot.slane %v1221, %v1225
        %v1227 = vlaneseq
        %v1228 = vshrl.u32 %v1227, 7
        %v1229 = vsub.s32 1, %v1228
        %v1230 = vrot.slane %v1221, %v1229
        %v1231 = vlaneseq
        %v1232 = vshrl.u32 %v1231, 7
        %v1233 = vsub.s32 2, %v1232
        %v1234 = vrot.slane %v1221, %v1233
        %v1235 = vlaneseq
        %v1236 = vshrl.u32 %v1235, 7
        %v1237 = vsub.s32 3, %v1236
        %v1238 = vrot.slane %v1221, %v1237
        %v1239 = vlaneseq
        %v1240 = vshrl.u32 %v1239, 7
        %v1241 = vsub.s32 4, %v1240
        %v1242 = vrot.slane %v1221, %v1241
        %v1243 = vlaneseq
        %v1244 = vshrl.u32 %v1243, 7
        %v1245 = vsub.s32 5, %v1244
        %v1246 = vrot.slane %v1221, %v1245
        %v1247 = vlaneseq
        %v1248 = vshrl.u32 %v1247, 7
        %v1249 = vsub.s32 6, %v1248
        %v1250 = vrot.slane %v1221, %v1249
        %v1251 = vlaneseq
        %v1252 = vshrl.u32 %v1251, 7
        %v1253 = vsub.s32 7, %v1252
        %v1254 = vrot.slane %v1221, %v1253
        %v1263 = vrcp.pop %v1226
        %v1264 = vmul.f32 %v1044, %v1263
        %v1265 = vmul.f32 %v1046, %v1263
        %v1266 = vrcp.pop %v1230
        %v1267 = vmul.f32 %v1048, %v1266
        %v1268 = vmul.f32 %v1050, %v1266
        %v1269 = vrcp.pop %v1234
        %v1270 = vmul.f32 %v1052, %v1269
        %v1271 = vmul.f32 %v1054, %v1269
        %v1272 = vrcp.pop %v1238
        %v1273 = vmul.f32 %v1056, %v1272
        %v1274 = vmul.f32 %v1058, %v1272
        %v1275 = vrcp.pop %v1242
        %v1276 = vmul.f32 %v1060, %v1275
        %v1277 = vmul.f32 %v1062, %v1275
        %v1278 = vrcp.pop %v1246
        %v1279 = vmul.f32 %v1064, %v1278
        %v1280 = vmul.f32 %v1066, %v1278
        %v1281 = vrcp.pop %v1250
        %v1282 = vmul.f32 %v1068, %v1281
        %v1283 = vmul.f32 %v1070, %v1281
        %v1284 = vrcp.pop %v1254
        %v1285 = vmul.f32 %v1072, %v1284
        %v1286 = vmul.f32 %v1074, %v1284
        %1288 = vset.pattern.permute.xlu0 0
        %1289 = vperm.xlu0 %1288, %v1264
        %v1290 = vpop.permute.xlu0 %1289
        %1293 = vset.pattern.permute.xlu0 0
        %1294 = vperm.xlu0 %1293, %v1265
        %v1295 = vpop.permute.xlu0 %1294
        %1298 = vset.pattern.permute.xlu0 0
        %1299 = vperm.xlu0 %1298, %v1267
        %v1300 = vpop.permute.xlu0 %1299
        %1303 = vset.pattern.permute.xlu0 0
        %1304 = vperm.xlu0 %1303, %v1268
        %v1305 = vpop.permute.xlu0 %1304
        %1308 = vset.pattern.permute.xlu0 0
        %1309 = vperm.xlu0 %1308, %v1270
        %v1310 = vpop.permute.xlu0 %1309
        %1313 = vset.pattern.permute.xlu0 0
        %1314 = vperm.xlu0 %1313, %v1271
        %v1315 = vpop.permute.xlu0 %1314
        %1318 = vset.pattern.permute.xlu0 0
        %1319 = vperm.xlu0 %1318, %v1273
        %v1320 = vpop.permute.xlu0 %1319
        %1323 = vset.pattern.permute.xlu0 0
        %1324 = vperm.xlu0 %1323, %v1274
        %v1325 = vpop.permute.xlu0 %1324
        %1328 = vset.pattern.permute.xlu0 0
        %1329 = vperm.xlu0 %1328, %v1276
        %v1330 = vpop.permute.xlu0 %1329
        %1333 = vset.pattern.permute.xlu0 0
        %1334 = vperm.xlu0 %1333, %v1277
        %v1335 = vpop.permute.xlu0 %1334
        %1338 = vset.pattern.permute.xlu0 0
        %1339 = vperm.xlu0 %1338, %v1279
        %v1340 = vpop.permute.xlu0 %1339
        %1343 = vset.pattern.permute.xlu0 0
        %1344 = vperm.xlu0 %1343, %v1280
        %v1345 = vpop.permute.xlu0 %1344
        %1348 = vset.pattern.permute.xlu0 0
        %1349 = vperm.xlu0 %1348, %v1282
        %v1350 = vpop.permute.xlu0 %1349
        %1353 = vset.pattern.permute.xlu0 0
        %1354 = vperm.xlu0 %1353, %v1283
        %v1355 = vpop.permute.xlu0 %1354
        %1358 = vset.pattern.permute.xlu0 0
        %1359 = vperm.xlu0 %1358, %v1285
        %v1360 = vpop.permute.xlu0 %1359
        %1363 = vset.pattern.permute.xlu0 0
        %1364 = vperm.xlu0 %1363, %v1286
        %v1365 = vpop.permute.xlu0 %1364
        %v1367 = vmul.f32 %v755, %v1290
        %v1368 = vmul.f32 %v756, %v1295
        %v1369 = vmul.f32 %v757, %v1300
        %v1370 = vmul.f32 %v758, %v1305
        %v1371 = vmul.f32 %v759, %v1310
        %v1372 = vmul.f32 %v760, %v1315
        %v1373 = vmul.f32 %v761, %v1320
        %v1374 = vmul.f32 %v762, %v1325
        %v1375 = vmul.f32 %v763, %v1330
        %v1376 = vmul.f32 %v764, %v1335
        %v1377 = vmul.f32 %v765, %v1340
        %v1378 = vmul.f32 %v766, %v1345
        %v1379 = vmul.f32 %v767, %v1350
        %v1380 = vmul.f32 %v768, %v1355
        %v1381 = vmul.f32 %v769, %v1360
        %v1382 = vmul.f32 %v770, %v1365
        %v1383 = vsel %vm470, %v1367, 0.0
        %v1384 = vsel %vm470, %v1368, 0.0
        %v1385 = vadd.f32 %v1383, %v1384
        %v1386 = vrot.slane %v1385, 4
        %v1387 = vadd.f32 %v1385, %v1386
        %v1388 = vrot.slane %v1387, 2
        %v1389 = vadd.f32 %v1387, %v1388
        %v1390 = vrot.slane %v1389, 1
        %v1391 = vadd.f32 %v1389, %v1390
        %v1392 = vsel %vm470, %v1369, 0.0
        %v1393 = vsel %vm470, %v1370, 0.0
        %v1394 = vadd.f32 %v1392, %v1393
        %v1395 = vrot.slane %v1394, 4
        %v1396 = vadd.f32 %v1394, %v1395
        %v1397 = vrot.slane %v1396, 2
        %v1398 = vadd.f32 %v1396, %v1397
        %v1399 = vrot.slane %v1398, 1
        %v1400 = vadd.f32 %v1398, %v1399
        %v1401 = vsel %vm470, %v1371, 0.0
        %v1402 = vsel %vm470, %v1372, 0.0
        %v1403 = vadd.f32 %v1401, %v1402
        %v1404 = vrot.slane %v1403, 4
        %v1405 = vadd.f32 %v1403, %v1404
        %v1406 = vrot.slane %v1405, 2
        %v1407 = vadd.f32 %v1405, %v1406
        %v1408 = vrot.slane %v1407, 1
        %v1409 = vadd.f32 %v1407, %v1408
        %v1410 = vsel %vm470, %v1373, 0.0
        %v1411 = vsel %vm470, %v1374, 0.0
        %v1412 = vadd.f32 %v1410, %v1411
        %v1413 = vrot.slane %v1412, 4
        %v1414 = vadd.f32 %v1412, %v1413
        %v1415 = vrot.slane %v1414, 2
        %v1416 = vadd.f32 %v1414, %v1415
        %v1417 = vrot.slane %v1416, 1
        %v1418 = vadd.f32 %v1416, %v1417
        %v1419 = vsel %vm470, %v1375, 0.0
        %v1420 = vsel %vm470, %v1376, 0.0
        %v1421 = vadd.f32 %v1419, %v1420
        %v1422 = vrot.slane %v1421, 4
        %v1423 = vadd.f32 %v1421, %v1422
        %v1424 = vrot.slane %v1423, 2
        %v1425 = vadd.f32 %v1423, %v1424
        %v1426 = vrot.slane %v1425, 1
        %v1427 = vadd.f32 %v1425, %v1426
        %v1428 = vsel %vm470, %v1377, 0.0
        %v1429 = vsel %vm470, %v1378, 0.0
        %v1430 = vadd.f32 %v1428, %v1429
        %v1431 = vrot.slane %v1430, 4
        %v1432 = vadd.f32 %v1430, %v1431
        %v1433 = vrot.slane %v1432, 2
        %v1434 = vadd.f32 %v1432, %v1433
        %v1435 = vrot.slane %v1434, 1
        %v1436 = vadd.f32 %v1434, %v1435
        %v1437 = vsel %vm470, %v1379, 0.0
        %v1438 = vsel %vm470, %v1380, 0.0
        %v1439 = vadd.f32 %v1437, %v1438
        %v1440 = vrot.slane %v1439, 4
        %v1441 = vadd.f32 %v1439, %v1440
        %v1442 = vrot.slane %v1441, 2
        %v1443 = vadd.f32 %v1441, %v1442
        %v1444 = vrot.slane %v1443, 1
        %v1445 = vadd.f32 %v1443, %v1444
        %v1446 = vsel %vm470, %v1381, 0.0
        %v1447 = vsel %vm470, %v1382, 0.0
        %v1448 = vadd.f32 %v1446, %v1447
        %v1449 = vrot.slane %v1448, 4
        %v1450 = vadd.f32 %v1448, %v1449
        %v1451 = vrot.slane %v1450, 2
        %v1452 = vadd.f32 %v1450, %v1451
        %v1453 = vrot.slane %v1452, 1
        %v1454 = vadd.f32 %v1452, %v1453
        %v1463 = vsel %vm967, %v1400, %v1391
        %v1464 = vsel %vm969, %v1409, %v1463
        %v1465 = vsel %vm971, %v1418, %v1464
        %v1466 = vsel %vm973, %v1427, %v1465
        %v1467 = vsel %vm975, %v1436, %v1466
        %v1468 = vsel %vm977, %v1445, %v1467
        %v1469 = vsel %vm979, %v1454, %v1468
        %1471 = vst.msk [vmem:[%s439] sm:$0xff] %vm470, %v1469
        %s1472 = sand.u32 %s221, 1
        %s1473 = scalar_lea.sflag [#allocation4], %s1472
        %s1474 = sand.u32 %s221, 1
        %s1475 = smul.addr %s1474, 8
        %s1476 = scalar_lea.vmem [#allocation13], %s1475
        // Predicated region
        $region77: #{tpu_custom_call.1} parent=51 // pred_check
          %p1477 = pneg %p231
        $region78: #{tpu_custom_call.1} parent=51 // pred_check_branch
          %1479 = sbr.rel (%p1477) target = $region80
        $region79: #{tpu_custom_call.1} parent=51 // pred_region
          %s1481 = ssub.s32 128, 128
          %1482 = vsyncadd %s1473, %s1481
          %s1483 = smul.addr %s30, 128
          %s1484 = scalar_lea.hbm %s8, %s1483
          %s1486 = sshll.u32 %s1476, 4
          %s1487 = int_to_ptr.vmem [resolvable:$true] %s1486
          %1489 = dma.vmem_to_hbm [thread:$0]  %s1487, 128, %s1484, %s1473
        $region80: #{tpu_custom_call.1} parent=51 // pred_fallthru
          _
      $region52: #{tpu_custom_call.1} parent=5 // pred_fallthru
        _
      %p1490 = scmp.le.s32.totalorder 2, %s25
      // Predicated region
      $region81: #{tpu_custom_call.1} parent=5 // pred_check
        %p1491 = pneg %p1490
      $region82: #{tpu_custom_call.1} parent=5 // pred_check_branch
        %1493 = sbr.rel (%p1491) target = $region84
      $region83: #{tpu_custom_call.1} parent=5 // pred_region
        %s1494 = ssub.s32 %s25, 2
        // Predicated region
        $region85: #{tpu_custom_call.1} parent=83 // pred_check
          %p1495 = pneg %p237
        $region86: #{tpu_custom_call.1} parent=83 // pred_check_branch
          %1497 = sbr.rel (%p1495) target = $region88
        $region87: #{tpu_custom_call.1} parent=83 // pred_region
          %s1498 = sand.u32 %s222, 1
          %s1499 = scalar_lea.sflag [#allocation4], %s1498
          %s1500 = sand.u32 %s222, 1
          %s1501 = smul.addr %s1500, 8
          %s1502 = scalar_lea.vmem [#allocation13], %s1501
          %1503 = dma.done %s1499, 128
        $region88: #{tpu_custom_call.1} parent=83 // pred_fallthru
          _
      $region84: #{tpu_custom_call.1} parent=5 // pred_fallthru
        _
    $region6: #{tpu_custom_call.1} parent=1 // loop_footer
      %s29 = sadd.s32 1, %s25
    $region7: #{tpu_custom_call.1} parent=1 // loop_footer_branch
      %24 = sbr.rel target = $region3
    $region8: #{tpu_custom_call.1} parent=1 // loop_exit
      _
    %1504 = vsyncpa [#allocation3], 1
    %s1505 = scalar_lea.sflag [#allocation3], 1
    %1506 = vsyncpa %s1505, 1
    %1507 = vsyncpa [#allocation6], 1
    %s1508 = scalar_lea.sflag [#allocation6], 1
    %1509 = vsyncpa %s1508, 1
    %1510 = vsyncpa [#allocation9], 1
    %1511 = vsyncpa [#allocation12], 1
    %1512 = vsyncpa [#allocation4], 1
    %s1513 = scalar_lea.sflag [#allocation4], 1
    %1514 = vsyncpa %s1513, 1

</llo_original>
